<compile_context>
chip_gen: v5e
topology: v5e:2x2
jax: 0.10.0
libtpu: 0.0.40
codegen_flags: <defaults>
</compile_context>

<pallas_src>
import functools

import jax
import jax.numpy as jnp
from jax import lax
from jax.experimental import pallas as pl
from jax.experimental.pallas import tpu as pltpu


# ------------------------------ helpers ---------------------------------------

def _round_up(x, m):
    return ((x + m - 1) // m) * m


def _pick_tm(R, cap=512):
    # Largest row-tile <= cap (multiple of 8) such that the grid has >= 2 steps
    # whenever R allows it (keeps both TensorCores busy on v7x).
    tm = _round_up(max(1, -(-R // 2)), 8)
    return min(cap, tm)


def _pad_rows(a, tm):
    R = a.shape[0]
    Rp = _round_up(R, tm)
    if Rp != R:
        a = jnp.pad(a, ((0, Rp - R), (0, 0)))
    return a, Rp


# ----------------------------- Pallas kernels ---------------------------------

def _heads_kernel(x_ref, w_ref, b_ref, o_ref):
    # Fused 5-way pointwise conv (+ folded BN + ReLU): one (tm, cin) @ (cin, 5F) matmul.
    y = jnp.dot(x_ref[...], w_ref[...], preferred_element_type=jnp.float32)
    o_ref[...] = jnp.maximum(y + b_ref[...], 0.0).astype(o_ref.dtype)


def _branch_fuse_kernel(heads_ref, t2_ref, t3_ref, t4_ref,
                        w2_ref, w3_ref, w4_ref, db_ref, fw_ref, fb_ref,
                        o_ref, *, scale, F):
    # Fused: three dilated 3x3 convs (single K=9F dot each, folded BN + ReLU),
    # the channel concat, the fusion 1x1 conv (+BN+ReLU), and the residual add.
    b1 = heads_ref[:, 0:F]              # branch1 output (already ReLU'd)
    bott = heads_ref[:, 4 * F:5 * F]    # bottleneck output (already ReLU'd)

    def dil(t_ref, w_ref, bias):
        y = jnp.dot(t_ref[...], w_ref[...], preferred_element_type=jnp.float32)
        return jnp.maximum(y + bias, 0.0)

    b2 = dil(t2_ref, w2_ref, db_ref[0:1, :])
    b3 = dil(t3_ref, w3_ref, db_ref[1:2, :])
    b4 = dil(t4_ref, w4_ref, db_ref[2:3, :])

    # fusion conv over the (virtual) concat: four K=F dots accumulated in f32 on the MXU.
    fu = (jnp.dot(b1, fw_ref[0:F, :], preferred_element_type=jnp.float32)
          + jnp.dot(b2, fw_ref[F:2 * F, :], preferred_element_type=jnp.float32)
          + jnp.dot(b3, fw_ref[2 * F:3 * F, :], preferred_element_type=jnp.float32)
          + jnp.dot(b4, fw_ref[3 * F:4 * F, :], preferred_element_type=jnp.float32))
    fu = jnp.maximum(fu + fb_ref[...], 0.0)
    o_ref[...] = (fu + scale * bott).astype(o_ref.dtype)


# ------------------------------ wrappers --------------------------------------

def heads_conv(x_flat, w, b, *, tm):
    R, cin = x_flat.shape
    cout = w.shape[1]
    x_pad, Rp = _pad_rows(x_flat, tm)
    out = pl.pallas_call(
        _heads_kernel,
        out_shape=jax.ShapeDtypeStruct((Rp, cout), x_flat.dtype),
        grid=(Rp // tm,),
        in_specs=[
            pl.BlockSpec((tm, cin), lambda i: (i, 0)),
            pl.BlockSpec((cin, cout), lambda i: (0, 0)),
            pl.BlockSpec((1, cout), lambda i: (0, 0)),
        ],
        out_specs=pl.BlockSpec((tm, cout), lambda i: (i, 0)),
        compiler_params=pltpu.CompilerParams(dimension_semantics=("parallel",)),
    )(x_pad, w, b.reshape(1, cout))
    return out[:R]


def branch_fusion(heads, t2, t3, t4, w2, w3, w4, db, fw, fb, *, scale, tm):
    R, c5 = heads.shape
    F = fw.shape[1]
    heads_p, Rp = _pad_rows(heads, tm)
    t2p, _ = _pad_rows(t2, tm)
    t3p, _ = _pad_rows(t3, tm)
    t4p, _ = _pad_rows(t4, tm)
    out = pl.pallas_call(
        functools.partial(_branch_fuse_kernel, scale=scale, F=F),
        out_shape=jax.ShapeDtypeStruct((Rp, F), heads.dtype),
        grid=(Rp // tm,),
        in_specs=[
            pl.BlockSpec((tm, c5), lambda i: (i, 0)),
            pl.BlockSpec((tm, 9 * F), lambda i: (i, 0)),
            pl.BlockSpec((tm, 9 * F), lambda i: (i, 0)),
            pl.BlockSpec((tm, 9 * F), lambda i: (i, 0)),
            pl.BlockSpec((9 * F, F), lambda i: (0, 0)),
            pl.BlockSpec((9 * F, F), lambda i: (0, 0)),
            pl.BlockSpec((9 * F, F), lambda i: (0, 0)),
            pl.BlockSpec((3, F), lambda i: (0, 0)),
            pl.BlockSpec((4 * F, F), lambda i: (0, 0)),
            pl.BlockSpec((1, F), lambda i: (0, 0)),
        ],
        out_specs=pl.BlockSpec((tm, F), lambda i: (i, 0)),
        compiler_params=pltpu.CompilerParams(dimension_semantics=("parallel",)),
    )(heads_p, t2p, t3p, t4p, w2, w3, w4, db, fw, fb.reshape(1, F))
    return out[:R]


def _make_taps(h_nhwc, d):
    # glue: zero-pad and gather the 9 dilated taps, lane-concatenated -> (R, 9F).
    # MACs stay inside the Pallas kernel as a single K=9F matmul.
    B, H, W, F = h_nhwc.shape
    xp = jnp.pad(h_nhwc, ((0, 0), (d, d), (d, d), (0, 0)))
    taps = [xp[:, ky * d:ky * d + H, kx * d:kx * d + W, :]
            for ky in range(3) for kx in range(3)]
    return jnp.concatenate(taps, axis=-1).reshape(B * H * W, 9 * F)


# --------------------------- parameter setup ----------------------------------

def _conv_bn_fold(key, w_shape, cout, eps=1e-5):
    k = jax.random.split(key, 6)
    w = 0.2 * jax.random.normal(k[0], w_shape, jnp.float32)
    b = 0.1 * jax.random.normal(k[1], (cout,), jnp.float32)
    gamma = 1.0 + 0.1 * jax.random.normal(k[2], (cout,), jnp.float32)
    beta = 0.1 * jax.random.normal(k[3], (cout,), jnp.float32)
    mean = 0.1 * jax.random.normal(k[4], (cout,), jnp.float32)
    var = jnp.abs(jax.random.normal(k[5], (cout,), jnp.float32)) + 0.5
    s = gamma / jnp.sqrt(var + eps)              # fold eval-mode BN into conv
    return w * s, (b - mean) * s + beta


def init_params(key, cin, filters):
    ks = jax.random.split(key, 10)
    p = {}
    p["b1_w"], p["b1_b"] = _conv_bn_fold(ks[0], (cin, filters), filters)
    p["b2h_w"], p["b2h_b"] = _conv_bn_fold(ks[1], (cin, filters), filters)
    p["b3h_w"], p["b3h_b"] = _conv_bn_fold(ks[2], (cin, filters), filters)
    p["b4h_w"], p["b4h_b"] = _conv_bn_fold(ks[3], (cin, filters), filters)
    p["b2_w"], p["b2_b"] = _conv_bn_fold(ks[4], (3, 3, filters, filters), filters)
    p["b3_w"], p["b3_b"] = _conv_bn_fold(ks[5], (3, 3, filters, filters), filters)
    p["b4_w"], p["b4_b"] = _conv_bn_fold(ks[6], (3, 3, filters, filters), filters)
    p["fu_w"], p["fu_b"] = _conv_bn_fold(ks[7], (4 * filters, filters), filters)
    p["bt_w"], p["bt_b"] = _conv_bn_fold(ks[8], (cin, filters), filters)
    return p


# ------------------------------ forward ---------------------------------------

def dilated_inception_block(x_nchw, params, scale=1.0):
    B, cin, H, W = x_nchw.shape
    F = params["b1_w"].shape[1]
    R = B * H * W
    tm = _pick_tm(R)

    x = jnp.transpose(x_nchw, (0, 2, 3, 1)).reshape(R, cin)   # NCHW -> rows x channels

    # pack the five pointwise heads: columns = [b1 | h2 | h3 | h4 | bottleneck]
    head_w = jnp.concatenate([params["b1_w"], params["b2h_w"], params["b3h_w"],
                              params["b4h_w"], params["bt_w"]], axis=1)
    head_b = jnp.concatenate([params["b1_b"], params["b2h_b"], params["b3h_b"],
                              params["b4h_b"], params["bt_b"]], axis=0)

    heads = heads_conv(x, head_w, head_b, tm=tm)               # (R, 5F)

    h = heads.reshape(B, H, W, 5 * F)
    t2 = _make_taps(h[..., F:2 * F], 2)                        # (R, 9F)
    t3 = _make_taps(h[..., 2 * F:3 * F], 4)
    t4 = _make_taps(h[..., 3 * F:4 * F], 8)

    w2 = params["b2_w"].reshape(9 * F, F)                      # HWIO flattened, matches tap order
    w3 = params["b3_w"].reshape(9 * F, F)
    w4 = params["b4_w"].reshape(9 * F, F)
    db = jnp.stack([params["b2_b"], params["b3_b"], params["b4_b"]], axis=0)

    out = branch_fusion(heads, t2, t3, t4, w2, w3, w4, db,
                        params["fu_w"], params["fu_b"], scale=scale, tm=tm)
    return jnp.transpose(out.reshape(B, H, W, F), (0, 3, 1, 2))   # -> NCHW


# ------------------------- pure-JAX reference ----------------------------------

def reference(x_nchw, p, scale=1.0):
    x = jnp.transpose(x_nchw, (0, 2, 3, 1))

    def pw(xx, w, b):
        return jnp.maximum(jnp.einsum("nhwc,cf->nhwf", xx, w) + b, 0.0)

    def dil(xx, w, b, d):
        y = lax.conv_general_dilated(
            xx, w, window_strides=(1, 1), padding=((d, d), (d, d)),
            rhs_dilation=(d, d),
            dimension_numbers=("NHWC", "HWIO", "NHWC"))
        return jnp.maximum(y + b, 0.0)

    b1 = pw(x, p["b1_w"], p["b1_b"])
    b2 = dil(pw(x, p["b2h_w"], p["b2h_b"]), p["b2_w"], p["b2_b"], 2)
    b3 = dil(pw(x, p["b3h_w"], p["b3h_b"]), p["b3_w"], p["b3_b"], 4)
    b4 = dil(pw(x, p["b4h_w"], p["b4h_b"]), p["b4_w"], p["b4_b"], 8)
    cat = jnp.concatenate([b1, b2, b3, b4], axis=-1)
    fu = pw(cat, p["fu_w"], p["fu_b"])
    bt = pw(x, p["bt_w"], p["bt_b"])
    return jnp.transpose(fu + scale * bt, (0, 3, 1, 2))


# --------------------------------- main ----------------------------------------

if __name__ == "__main__":
    B, Cin, H, W, FILTERS = 2, 4, 16, 16, 8
    SCALE = 0.5

    key = jax.random.PRNGKey(0)
    kx, kp = jax.random.split(key)
    x = jax.random.normal(kx, (B, Cin, H, W), jnp.float32)
    params = init_params(kp, Cin, FILTERS)

    fwd = jax.jit(dilated_inception_block, static_argnames=("scale",))
    out = jax.block_until_ready(fwd(x, params, scale=SCALE))
    assert out.shape == (B, FILTERS, H, W), out.shape

    ref = jax.block_until_ready(reference(x, params, scale=SCALE))
    err = float(jnp.max(jnp.abs(out - ref)))
    assert jnp.allclose(out, ref, atol=1e-3, rtol=1e-3), f"max abs err {err}"

    print("KERNEL_OK")
</pallas_src>

<mosaic_0001>
module attributes {stable_mosaic.version = 11 : i64} {
  func.func @_heads_kernel(%arg0: i32, %arg1: memref<256x4xf32, #tpu.memory_space<vmem>>, %arg2: memref<4x40xf32, #tpu.memory_space<vmem>>, %arg3: memref<1x40xf32, #tpu.memory_space<vmem>>, %arg4: memref<256x40xf32, #tpu.memory_space<vmem>>) attributes {dimension_semantics = [#tpu.dimension_semantics<parallel>], iteration_bounds = array<i64: 2>, scalar_prefetch = 0 : i64, scratch_operands = 0 : i64, tpu.core_type = #tpu.core_type<tc>, window_params = [{transform_indices = @transform_0, window_bounds = array<i64: 256, 4>}, {pipeline_mode = #tpu.pipeline_mode<synchronous>, transform_indices = @transform_1, window_bounds = array<i64: 4, 40>}, {pipeline_mode = #tpu.pipeline_mode<synchronous>, transform_indices = @transform_2, window_bounds = array<i64: 1, 40>}, {transform_indices = @transform_3, window_bounds = array<i64: 256, 40>}]} {
    %c0 = arith.constant 0 : index
    %c0_0 = arith.constant 0 : index
    %0 = vector.load %arg1[%c0, %c0_0] : memref<256x4xf32, #tpu.memory_space<vmem>>, vector<256x4xf32>
    %c0_1 = arith.constant 0 : index
    %c0_2 = arith.constant 0 : index
    %1 = vector.load %arg2[%c0_1, %c0_2] : memref<4x40xf32, #tpu.memory_space<vmem>>, vector<4x40xf32>
    %cst = arith.constant dense<0.000000e+00> : vector<256x40xf32>
    %2 = tpu.matmul %0, %1, %cst {dimension_numbers = #tpu.dot_dimension_numbers<[1], [0], [0], [1], [0, 0, 1, 1], [], []>} : vector<256x4xf32>, vector<4x40xf32>, vector<256x40xf32> -> vector<256x40xf32>
    %c0_3 = arith.constant 0 : index
    %c0_4 = arith.constant 0 : index
    %3 = vector.load %arg3[%c0_3, %c0_4] : memref<1x40xf32, #tpu.memory_space<vmem>>, vector<1x40xf32>
    %4 = vector.broadcast %3 : vector<1x40xf32> to vector<256x40xf32>
    %5 = arith.addf %2, %4 : vector<256x40xf32>
    %cst_5 = arith.constant 0.000000e+00 : f32
    %6 = vector.broadcast %cst_5 : f32 to vector<256x40xf32>
    %7 = arith.maximumf %5, %6 : vector<256x40xf32>
    %c0_6 = arith.constant 0 : index
    %c0_7 = arith.constant 0 : index
    %8 = vector.load %arg4[%c0_6, %c0_7] : memref<256x40xf32, #tpu.memory_space<vmem>>, vector<256x40xf32>
    tpu.vector_store %arg4[%c0_6, %c0_7], %7 {strides = array<i32>} : memref<256x40xf32, #tpu.memory_space<vmem>>, vector<256x40xf32>,
    return
  }
  func.func @transform_0(%arg0: i32) -> (i32, i32) {
    %c0_i32 = arith.constant 0 : i32
    %c0_i32_0 = arith.constant 0 : i32
    return %arg0, %c0_i32 : i32, i32
  }
  func.func @transform_1(%arg0: i32) -> (i32, i32) {
    %c0_i32 = arith.constant 0 : i32
    %c0_i32_0 = arith.constant 0 : i32
    %c0_i32_1 = arith.constant 0 : i32
    return %c0_i32, %c0_i32_0 : i32, i32
  }
  func.func @transform_2(%arg0: i32) -> (i32, i32) {
    %c0_i32 = arith.constant 0 : i32
    %c0_i32_0 = arith.constant 0 : i32
    %c0_i32_1 = arith.constant 0 : i32
    return %c0_i32, %c0_i32_0 : i32, i32
  }
  func.func @transform_3(%arg0: i32) -> (i32, i32) {
    %c0_i32 = arith.constant 0 : i32
    %c0_i32_0 = arith.constant 0 : i32
    return %arg0, %c0_i32 : i32, i32
  }
}

module attributes {stable_mosaic.version = 11 : i64} {
  func.func @_branch_fuse_kernel(%arg0: i32, %arg1: memref<256x40xf32, #tpu.memory_space<vmem>>, %arg2: memref<256x72xf32, #tpu.memory_space<vmem>>, %arg3: memref<256x72xf32, #tpu.memory_space<vmem>>, %arg4: memref<256x72xf32, #tpu.memory_space<vmem>>, %arg5: memref<72x8xf32, #tpu.memory_space<vmem>>, %arg6: memref<72x8xf32, #tpu.memory_space<vmem>>, %arg7: memref<72x8xf32, #tpu.memory_space<vmem>>, %arg8: memref<3x8xf32, #tpu.memory_space<vmem>>, %arg9: memref<32x8xf32, #tpu.memory_space<vmem>>, %arg10: memref<1x8xf32, #tpu.memory_space<vmem>>, %arg11: memref<256x8xf32, #tpu.memory_space<vmem>>) attributes {dimension_semantics = [#tpu.dimension_semantics<parallel>], iteration_bounds = array<i64: 2>, scalar_prefetch = 0 : i64, scratch_operands = 0 : i64, tpu.core_type = #tpu.core_type<tc>, window_params = [{transform_indices = @transform_0, window_bounds = array<i64: 256, 40>}, {transform_indices = @transform_1, window_bounds = array<i64: 256, 72>}, {transform_indices = @transform_2, window_bounds = array<i64: 256, 72>}, {transform_indices = @transform_3, window_bounds = array<i64: 256, 72>}, {pipeline_mode = #tpu.pipeline_mode<synchronous>, transform_indices = @transform_4, window_bounds = array<i64: 72, 8>}, {pipeline_mode = #tpu.pipeline_mode<synchronous>, transform_indices = @transform_5, window_bounds = array<i64: 72, 8>}, {pipeline_mode = #tpu.pipeline_mode<synchronous>, transform_indices = @transform_6, window_bounds = array<i64: 72, 8>}, {pipeline_mode = #tpu.pipeline_mode<synchronous>, transform_indices = @transform_7, window_bounds = array<i64: 3, 8>}, {pipeline_mode = #tpu.pipeline_mode<synchronous>, transform_indices = @transform_8, window_bounds = array<i64: 32, 8>}, {pipeline_mode = #tpu.pipeline_mode<synchronous>, transform_indices = @transform_9, window_bounds = array<i64: 1, 8>}, {transform_indices = @transform_10, window_bounds = array<i64: 256, 8>}]} {
    %c0 = arith.constant 0 : index
    %c0_0 = arith.constant 0 : index
    %0 = vector.load %arg1[%c0, %c0_0] : memref<256x40xf32, #tpu.memory_space<vmem>>, vector<256x8xf32>
    %c0_1 = arith.constant 0 : index
    %c32 = arith.constant 32 : index
    %1 = vector.load %arg1[%c0_1, %c32] : memref<256x40xf32, #tpu.memory_space<vmem>>, vector<256x8xf32>
    %c0_2 = arith.constant 0 : index
    %c0_3 = arith.constant 0 : index
    %2 = vector.load %arg8[%c0_2, %c0_3] : memref<3x8xf32, #tpu.memory_space<vmem>>, vector<1x8xf32>
    %c0_4 = arith.constant 0 : index
    %c0_5 = arith.constant 0 : index
    %3 = vector.load %arg2[%c0_4, %c0_5] : memref<256x72xf32, #tpu.memory_space<vmem>>, vector<256x72xf32>
    %c0_6 = arith.constant 0 : index
    %c0_7 = arith.constant 0 : index
    %4 = vector.load %arg5[%c0_6, %c0_7] : memref<72x8xf32, #tpu.memory_space<vmem>>, vector<72x8xf32>
    %cst = arith.constant dense<0.000000e+00> : vector<256x8xf32>
    %5 = tpu.matmul %3, %4, %cst {dimension_numbers = #tpu.dot_dimension_numbers<[1], [0], [0], [1], [0, 0, 1, 1], [], []>} : vector<256x72xf32>, vector<72x8xf32>, vector<256x8xf32> -> vector<256x8xf32>
    %6 = vector.broadcast %2 : vector<1x8xf32> to vector<256x8xf32>
    %7 = arith.addf %5, %6 : vector<256x8xf32>
    %cst_8 = arith.constant 0.000000e+00 : f32
    %8 = vector.broadcast %cst_8 : f32 to vector<256x8xf32>
    %9 = arith.maximumf %7, %8 : vector<256x8xf32>
    %c1 = arith.constant 1 : index
    %c0_9 = arith.constant 0 : index
    %10 = vector.load %arg8[%c1, %c0_9] : memref<3x8xf32, #tpu.memory_space<vmem>>, vector<1x8xf32>
    %c0_10 = arith.constant 0 : index
    %c0_11 = arith.constant 0 : index
    %11 = vector.load %arg3[%c0_10, %c0_11] : memref<256x72xf32, #tpu.memory_space<vmem>>, vector<256x72xf32>
    %c0_12 = arith.constant 0 : index
    %c0_13 = arith.constant 0 : index
    %12 = vector.load %arg6[%c0_12, %c0_13] : memref<72x8xf32, #tpu.memory_space<vmem>>, vector<72x8xf32>
    %cst_14 = arith.constant dense<0.000000e+00> : vector<256x8xf32>
    %13 = tpu.matmul %11, %12, %cst_14 {dimension_numbers = #tpu.dot_dimension_numbers<[1], [0], [0], [1], [0, 0, 1, 1], [], []>} : vector<256x72xf32>, vector<72x8xf32>, vector<256x8xf32> -> vector<256x8xf32>
    %14 = vector.broadcast %10 : vector<1x8xf32> to vector<256x8xf32>
    %15 = arith.addf %13, %14 : vector<256x8xf32>
    %cst_15 = arith.constant 0.000000e+00 : f32
    %16 = vector.broadcast %cst_15 : f32 to vector<256x8xf32>
    %17 = arith.maximumf %15, %16 : vector<256x8xf32>
    %c2 = arith.constant 2 : index
    %c0_16 = arith.constant 0 : index
    %18 = vector.load %arg8[%c2, %c0_16] : memref<3x8xf32, #tpu.memory_space<vmem>>, vector<1x8xf32>
    %c0_17 = arith.constant 0 : index
    %c0_18 = arith.constant 0 : index
    %19 = vector.load %arg4[%c0_17, %c0_18] : memref<256x72xf32, #tpu.memory_space<vmem>>, vector<256x72xf32>
    %c0_19 = arith.constant 0 : index
    %c0_20 = arith.constant 0 : index
    %20 = vector.load %arg7[%c0_19, %c0_20] : memref<72x8xf32, #tpu.memory_space<vmem>>, vector<72x8xf32>
    %cst_21 = arith.constant dense<0.000000e+00> : vector<256x8xf32>
    %21 = tpu.matmul %19, %20, %cst_21 {dimension_numbers = #tpu.dot_dimension_numbers<[1], [0], [0], [1], [0, 0, 1, 1], [], []>} : vector<256x72xf32>, vector<72x8xf32>, vector<256x8xf32> -> vector<256x8xf32>
    %22 = vector.broadcast %18 : vector<1x8xf32> to vector<256x8xf32>
    %23 = arith.addf %21, %22 : vector<256x8xf32>
    %cst_22 = arith.constant 0.000000e+00 : f32
    %24 = vector.broadcast %cst_22 : f32 to vector<256x8xf32>
    %25 = arith.maximumf %23, %24 : vector<256x8xf32>
    %c0_23 = arith.constant 0 : index
    %c0_24 = arith.constant 0 : index
    %26 = vector.load %arg9[%c0_23, %c0_24] : memref<32x8xf32, #tpu.memory_space<vmem>>, vector<8x8xf32>
    %cst_25 = arith.constant dense<0.000000e+00> : vector<256x8xf32>
    %27 = tpu.matmul %0, %26, %cst_25 {dimension_numbers = #tpu.dot_dimension_numbers<[1], [0], [0], [1], [0, 0, 1, 1], [], []>} : vector<256x8xf32>, vector<8x8xf32>, vector<256x8xf32> -> vector<256x8xf32>
    %c8 = arith.constant 8 : index
    %c0_26 = arith.constant 0 : index
    %28 = vector.load %arg9[%c8, %c0_26] : memref<32x8xf32, #tpu.memory_space<vmem>>, vector<8x8xf32>
    %cst_27 = arith.constant dense<0.000000e+00> : vector<256x8xf32>
    %29 = tpu.matmul %9, %28, %cst_27 {dimension_numbers = #tpu.dot_dimension_numbers<[1], [0], [0], [1], [0, 0, 1, 1], [], []>} : vector<256x8xf32>, vector<8x8xf32>, vector<256x8xf32> -> vector<256x8xf32>
    %30 = arith.addf %27, %29 : vector<256x8xf32>
    %c16 = arith.constant 16 : index
    %c0_28 = arith.constant 0 : index
    %31 = vector.load %arg9[%c16, %c0_28] : memref<32x8xf32, #tpu.memory_space<vmem>>, vector<8x8xf32>
    %cst_29 = arith.constant dense<0.000000e+00> : vector<256x8xf32>
    %32 = tpu.matmul %17, %31, %cst_29 {dimension_numbers = #tpu.dot_dimension_numbers<[1], [0], [0], [1], [0, 0, 1, 1], [], []>} : vector<256x8xf32>, vector<8x8xf32>, vector<256x8xf32> -> vector<256x8xf32>
    %33 = arith.addf %30, %32 : vector<256x8xf32>
    %c24 = arith.constant 24 : index
    %c0_30 = arith.constant 0 : index
    %34 = vector.load %arg9[%c24, %c0_30] : memref<32x8xf32, #tpu.memory_space<vmem>>, vector<8x8xf32>
    %cst_31 = arith.constant dense<0.000000e+00> : vector<256x8xf32>
    %35 = tpu.matmul %25, %34, %cst_31 {dimension_numbers = #tpu.dot_dimension_numbers<[1], [0], [0], [1], [0, 0, 1, 1], [], []>} : vector<256x8xf32>, vector<8x8xf32>, vector<256x8xf32> -> vector<256x8xf32>
    %36 = arith.addf %33, %35 : vector<256x8xf32>
    %c0_32 = arith.constant 0 : index
    %c0_33 = arith.constant 0 : index
    %37 = vector.load %arg10[%c0_32, %c0_33] : memref<1x8xf32, #tpu.memory_space<vmem>>, vector<1x8xf32>
    %38 = vector.broadcast %37 : vector<1x8xf32> to vector<256x8xf32>
    %39 = arith.addf %36, %38 : vector<256x8xf32>
    %cst_34 = arith.constant 0.000000e+00 : f32
    %40 = vector.broadcast %cst_34 : f32 to vector<256x8xf32>
    %41 = arith.maximumf %39, %40 : vector<256x8xf32>
    %cst_35 = arith.constant 5.000000e-01 : f32
    %42 = vector.broadcast %cst_35 : f32 to vector<256x8xf32>
    %43 = arith.mulf %42, %1 : vector<256x8xf32>
    %44 = arith.addf %41, %43 : vector<256x8xf32>
    %c0_36 = arith.constant 0 : index
    %c0_37 = arith.constant 0 : index
    %45 = vector.load %arg11[%c0_36, %c0_37] : memref<256x8xf32, #tpu.memory_space<vmem>>, vector<256x8xf32>
    tpu.vector_store %arg11[%c0_36, %c0_37], %44 {strides = array<i32>} : memref<256x8xf32, #tpu.memory_space<vmem>>, vector<256x8xf32>,
    return
  }
  func.func @transform_0(%arg0: i32) -> (i32, i32) {
    %c0_i32 = arith.constant 0 : i32
    %c0_i32_0 = arith.constant 0 : i32
    return %arg0, %c0_i32 : i32, i32
  }
  func.func @transform_1(%arg0: i32) -> (i32, i32) {
    %c0_i32 = arith.constant 0 : i32
    %c0_i32_0 = arith.constant 0 : i32
    return %arg0, %c0_i32 : i32, i32
  }
  func.func @transform_2(%arg0: i32) -> (i32, i32) {
    %c0_i32 = arith.constant 0 : i32
    %c0_i32_0 = arith.constant 0 : i32
    return %arg0, %c0_i32 : i32, i32
  }
  func.func @transform_3(%arg0: i32) -> (i32, i32) {
    %c0_i32 = arith.constant 0 : i32
    %c0_i32_0 = arith.constant 0 : i32
    return %arg0, %c0_i32 : i32, i32
  }
  func.func @transform_4(%arg0: i32) -> (i32, i32) {
    %c0_i32 = arith.constant 0 : i32
    %c0_i32_0 = arith.constant 0 : i32
    %c0_i32_1 = arith.constant 0 : i32
    return %c0_i32, %c0_i32_0 : i32, i32
  }
  func.func @transform_5(%arg0: i32) -> (i32, i32) {
    %c0_i32 = arith.constant 0 : i32
    %c0_i32_0 = arith.constant 0 : i32
    %c0_i32_1 = arith.constant 0 : i32
    return %c0_i32, %c0_i32_0 : i32, i32
  }
  func.func @transform_6(%arg0: i32) -> (i32, i32) {
    %c0_i32 = arith.constant 0 : i32
    %c0_i32_0 = arith.constant 0 : i32
    %c0_i32_1 = arith.constant 0 : i32
    return %c0_i32, %c0_i32_0 : i32, i32
  }
  func.func @transform_7(%arg0: i32) -> (i32, i32) {
    %c0_i32 = arith.constant 0 : i32
    %c0_i32_0 = arith.constant 0 : i32
    %c0_i32_1 = arith.constant 0 : i32
    return %c0_i32, %c0_i32_0 : i32, i32
  }
  func.func @transform_8(%arg0: i32) -> (i32, i32) {
    %c0_i32 = arith.constant 0 : i32
    %c0_i32_0 = arith.constant 0 : i32
    %c0_i32_1 = arith.constant 0 : i32
    return %c0_i32, %c0_i32_0 : i32, i32
  }
  func.func @transform_9(%arg0: i32) -> (i32, i32) {
    %c0_i32 = arith.constant 0 : i32
    %c0_i32_0 = arith.constant 0 : i32
    %c0_i32_1 = arith.constant 0 : i32
    return %c0_i32, %c0_i32_0 : i32, i32
  }
  func.func @transform_10(%arg0: i32) -> (i32, i32) {
    %c0_i32 = arith.constant 0 : i32
    %c0_i32_0 = arith.constant 0 : i32
    return %arg0, %c0_i32 : i32, i32
  }
}

</mosaic_0001>

<llo_original>
// kernel: dilated_inception_block.2
$region0: #{dilated_inception_block.2}
  #allocation0 [shape = 'u32[]', space=smem, size = 0x4, offset = 0x4, fixed_abs, tag = 'smem constant byte address 0x4 - core index']
  #allocation1 [shape = 'u32[72,128]{1,0:T(1,128)}', space=vmem, size = 0x9000, scoped, tag = 'internal scratch']
  %s0 = inlined_call_operand.vmem [shape: f32[512,4], index: 0, kind: input, shape index: {}]
  %s1 = inlined_call_operand.vmem [shape: f32[4,40], index: 1, kind: input, shape index: {}]
  %s2 = inlined_call_operand.vmem [shape: f32[1,40], index: 2, kind: input, shape index: {}]
  %s3 = inlined_call_operand.vmem [shape: f32[512,40], index: 3, kind: output, shape index: {}]
  %s4 = sld [smem:[#allocation0]]
  $region45: #{dilated_inception_block.2} parent=0
    _
  %s6 = ssub.s32 1, %s4
  %s7 = scalar_select 0, %s6, %s4
  loop: start=0, step=1, limit=4
  $region2: #{dilated_inception_block.2} parent=0 // loop_pre_header
    _
  $region3: #{dilated_inception_block.2} parent=0 // loop_header
    %s9 = sphi 0, %s13
    %p10 = scmp.ge.s32.totalorder %s9, 4
    %s19 = sphi 0, %s21
    %s22 = sphi 0, %s19
    %s23 = sphi 0, %s22
    %s39 = sphi 0, %s23
    %s43 = sphi 0, %s43
    %s45 = sphi 0, %s43
    %s46 = sphi 0, %s45
    %s60 = sphi 0, %s46
    %s64 = sphi 0, %s64
    %s66 = sphi 0, %s64
    %s67 = sphi 0, %s66
    %s81 = sphi 0, %s67
    %s87 = sphi 0, %s89
    %s90 = sphi 0, %s87
    %s91 = sphi 0, %s90
    %s107 = sphi 0, %s91
  $region4: #{dilated_inception_block.2} parent=0 // loop_header_branch
    %12 = sbr.rel (%p10) target = $region8
  $region5: #{dilated_inception_block.2} parent=0 // loop_body
    %s14 = ssub.s32 %s9, 1
    %s15 = ssub.s32 %s9, 2
    %s16 = sadd.s32 %s9, 1
    %s17 = ssub.s32 %s9, %s16
    %p18 = scmp.eq.s32.totalorder %s17, 0
    %s20 = sadd.s32 %s19, 1
    %s21 = scalar_select %p18, %s19, %s20
    %p24 = pneg %p18
    %p25 = scmp.eq.s32.totalorder %s9, 1
    %p26 = por %p24, %p25
    %p27 = scmp.ne.s32.totalorder %s19, %s22
    %p28 = scmp.eq.s32.totalorder %s9, 0
    %p29 = por %p27, %p28
    %p30 = scmp.ne.s32.totalorder %s19, %s22
    %p31 = scmp.eq.s32.totalorder %s14, 1
    %p32 = por %p30, %p31
    %p33 = scmp.ne.s32.totalorder %s22, %s23
    %p34 = scmp.eq.s32.totalorder %s14, 0
    %p35 = por %p33, %p34
    %p36 = scmp.ne.s32.totalorder %s22, %s23
    %p37 = scmp.eq.s32.totalorder %s15, 1
    %p38 = por %p36, %p37
    %p40 = scmp.ne.s32.totalorder %s23, %s39
    %p41 = scmp.eq.s32.totalorder %s15, 0
    %p42 = por %p40, %p41
    %s44 = sadd.s32 %s43, 1
    %p47 = scmp.eq.s32.totalorder %s9, 1
    %p48 = scmp.ne.s32.totalorder %s43, %s45
    %p49 = scmp.eq.s32.totalorder %s9, 0
    %p50 = por %p48, %p49
    %p51 = scmp.ne.s32.totalorder %s43, %s45
    %p52 = scmp.eq.s32.totalorder %s14, 1
    %p53 = por %p51, %p52
    %p54 = scmp.ne.s32.totalorder %s45, %s46
    %p55 = scmp.eq.s32.totalorder %s14, 0
    %p56 = por %p54, %p55
    %p57 = scmp.ne.s32.totalorder %s45, %s46
    %p58 = scmp.eq.s32.totalorder %s15, 1
    %p59 = por %p57, %p58
    %p61 = scmp.ne.s32.totalorder %s46, %s60
    %p62 = scmp.eq.s32.totalorder %s15, 0
    %p63 = por %p61, %p62
    %s65 = sadd.s32 %s64, 1
    %p68 = scmp.eq.s32.totalorder %s9, 1
    %p69 = scmp.ne.s32.totalorder %s64, %s66
    %p70 = scmp.eq.s32.totalorder %s9, 0
    %p71 = por %p69, %p70
    %p72 = scmp.ne.s32.totalorder %s64, %s66
    %p73 = scmp.eq.s32.totalorder %s14, 1
    %p74 = por %p72, %p73
    %p75 = scmp.ne.s32.totalorder %s66, %s67
    %p76 = scmp.eq.s32.totalorder %s14, 0
    %p77 = por %p75, %p76
    %p78 = scmp.ne.s32.totalorder %s66, %s67
    %p79 = scmp.eq.s32.totalorder %s15, 1
    %p80 = por %p78, %p79
    %p82 = scmp.ne.s32.totalorder %s67, %s81
    %p83 = scmp.eq.s32.totalorder %s15, 0
    %p84 = por %p82, %p83
    %s85 = ssub.s32 %s9, %s16
    %p86 = scmp.eq.s32.totalorder %s85, 0
    %s88 = sadd.s32 %s87, 1
    %s89 = scalar_select %p86, %s87, %s88
    %p92 = pneg %p86
    %p93 = scmp.eq.s32.totalorder %s9, 1
    %p94 = por %p92, %p93
    %p95 = scmp.ne.s32.totalorder %s87, %s90
    %p96 = scmp.eq.s32.totalorder %s9, 0
    %p97 = por %p95, %p96
    %p98 = scmp.ne.s32.totalorder %s87, %s90
    %p99 = scmp.eq.s32.totalorder %s14, 1
    %p100 = por %p98, %p99
    %p101 = scmp.ne.s32.totalorder %s90, %s91
    %p102 = scmp.eq.s32.totalorder %s14, 0
    %p103 = por %p101, %p102
    %p104 = scmp.ne.s32.totalorder %s90, %s91
    %p105 = scmp.eq.s32.totalorder %s15, 1
    %p106 = por %p104, %p105
    %p108 = scmp.ne.s32.totalorder %s91, %s107
    %p109 = scmp.eq.s32.totalorder %s15, 0
    %p110 = por %p108, %p109
    %p111 = scmp.le.s32.totalorder 1, %s9
    %p112 = scmp.lt.s32.totalorder %s9, 3
    %p113 = pnand %p111, %p112
    %p114 = pneg %p113
    // Predicated region
    $region9: #{dilated_inception_block.2} parent=5 // pred_check
      _
    $region10: #{dilated_inception_block.2} parent=5 // pred_check_branch
      %116 = sbr.rel (%p113) target = $region12
    $region11: #{dilated_inception_block.2} parent=5 // pred_region
      %s117 = ssub.s32 %s9, 1
      // Predicated region
      $region13: #{dilated_inception_block.2} parent=11 // pred_check
        %p118 = pneg %p56
      $region14: #{dilated_inception_block.2} parent=11 // pred_check_branch
        %120 = sbr.rel (%p118) target = $region16
      $region15: #{dilated_inception_block.2} parent=11 // pred_region
        _
      $region16: #{dilated_inception_block.2} parent=11 // pred_fallthru
        _
      // Predicated region
      $region17: #{dilated_inception_block.2} parent=11 // pred_check
        %p121 = pneg %p77
      $region18: #{dilated_inception_block.2} parent=11 // pred_check_branch
        %123 = sbr.rel (%p121) target = $region20
      $region19: #{dilated_inception_block.2} parent=11 // pred_region
        _
      $region20: #{dilated_inception_block.2} parent=11 // pred_fallthru
        _
    $region12: #{dilated_inception_block.2} parent=5 // pred_fallthru
      _
    %p124 = scmp.lt.s32.totalorder %s9, 2
    // Predicated region
    $region21: #{dilated_inception_block.2} parent=5 // pred_check
      %p125 = pneg %p124
    $region22: #{dilated_inception_block.2} parent=5 // pred_check_branch
      %127 = sbr.rel (%p125) target = $region24
    $region23: #{dilated_inception_block.2} parent=5 // pred_region
      // Predicated region
      $region25: #{dilated_inception_block.2} parent=23 // pred_check
        %p128 = pneg %p29
      $region26: #{dilated_inception_block.2} parent=23 // pred_check_branch
        %130 = sbr.rel (%p128) target = $region28
      $region27: #{dilated_inception_block.2} parent=23 // pred_region
        %s131 = smul.u32 32, %s9
        %p132 = scmp.lt.s32.totalorder %s131, 63
        %s133 = scalar_select %p132, %s131, 63
        %s134 = smul.addr %s133, 8
        %s135 = scalar_lea.vmem %s0, %s134
        %s136 = smul.u32 32, %s9
      $region28: #{dilated_inception_block.2} parent=23 // pred_fallthru
        _
    $region24: #{dilated_inception_block.2} parent=5 // pred_fallthru
      _
    %p137 = scmp.le.s32.totalorder 1, %s9
    %p138 = scmp.lt.s32.totalorder %s9, 3
    %p139 = pnand %p137, %p138
    %p140 = pneg %p139
    // Predicated region
    $region29: #{dilated_inception_block.2} parent=5 // pred_check
      _
    $region30: #{dilated_inception_block.2} parent=5 // pred_check_branch
      %142 = sbr.rel (%p139) target = $region32
    $region31: #{dilated_inception_block.2} parent=5 // pred_region
      %s143 = ssub.s32 %s9, 1
      %s144 = smul.u32 32, %s14
      %p145 = scmp.lt.s32.totalorder %s144, 63
      %s146 = scalar_select %p145, %s144, 63
      %s147 = smul.addr %s146, 8
      %s148 = scalar_lea.vmem %s0, %s147
      %p149 = pneg %p35
      %p150 = pneg %p32
      %p151 = pneg %p56
      %p152 = pneg %p53
      %p153 = pneg %p77
      %p154 = pneg %p74
      %p155 = pneg %p103
      %p156 = pneg %p100
      %s157 = smul.u32 32, %s14
      %p158 = scmp.lt.s32.totalorder %s157, 63
      %s159 = scalar_select %p158, %s157, 63
      %s160 = smul.addr %s159, 8
      %s161 = scalar_lea.vmem %s3, %s160
      %s162 = smul.u32 32, %s14
      %p163 = scmp.lt.s32.totalorder %s162, 63
      %s164 = scalar_select %p163, %s162, 63
      %s165 = smul.addr %s164, 8
      %s166 = scalar_lea.vmem %s0, %s165
      %s167 = smul.u32 32, %s14
      %s168 = smul.u32 32, %s14
      %p169 = scmp.lt.s32.totalorder %s168, 63
      %s170 = scalar_select %p169, %s168, 63
      %s171 = smul.addr %s170, 8
      %s172 = scalar_lea.vmem %s3, %s171
      %s173 = smul.u32 32, %s14
      %v174 = vld [vmem:[%s166] sm:$0xff]
      %v175 = vld [vmem:[%s166 + $0x8] sm:$0xff]
      %v176 = vld [vmem:[%s166 + $0x10] sm:$0xff]
      %v177 = vld [vmem:[%s166 + $0x18] sm:$0xff]
      %v178 = vld [vmem:[%s166 + $0x20] sm:$0xff]
      %v179 = vld [vmem:[%s166 + $0x28] sm:$0xff]
      %v180 = vld [vmem:[%s166 + $0x30] sm:$0xff]
      %v181 = vld [vmem:[%s166 + $0x38] sm:$0xff]
      %v182 = vld [vmem:[%s166 + $0x40] sm:$0xff]
      %v183 = vld [vmem:[%s166 + $0x48] sm:$0xff]
      %v184 = vld [vmem:[%s166 + $0x50] sm:$0xff]
      %v185 = vld [vmem:[%s166 + $0x58] sm:$0xff]
      %v186 = vld [vmem:[%s166 + $0x60] sm:$0xff]
      %v187 = vld [vmem:[%s166 + $0x68] sm:$0xff]
      %v188 = vld [vmem:[%s166 + $0x70] sm:$0xff]
      %v189 = vld [vmem:[%s166 + $0x78] sm:$0xff]
      %v190 = vld [vmem:[%s166 + $0x80] sm:$0xff]
      %v191 = vld [vmem:[%s166 + $0x88] sm:$0xff]
      %v192 = vld [vmem:[%s166 + $0x90] sm:$0xff]
      %v193 = vld [vmem:[%s166 + $0x98] sm:$0xff]
      %v194 = vld [vmem:[%s166 + $0xa0] sm:$0xff]
      %v195 = vld [vmem:[%s166 + $0xa8] sm:$0xff]
      %v196 = vld [vmem:[%s166 + $0xb0] sm:$0xff]
      %v197 = vld [vmem:[%s166 + $0xb8] sm:$0xff]
      %v198 = vld [vmem:[%s166 + $0xc0] sm:$0xff]
      %v199 = vld [vmem:[%s166 + $0xc8] sm:$0xff]
      %v200 = vld [vmem:[%s166 + $0xd0] sm:$0xff]
      %v201 = vld [vmem:[%s166 + $0xd8] sm:$0xff]
      %v202 = vld [vmem:[%s166 + $0xe0] sm:$0xff]
      %v203 = vld [vmem:[%s166 + $0xe8] sm:$0xff]
      %v204 = vld [vmem:[%s166 + $0xf0] sm:$0xff]
      %v205 = vld [vmem:[%s166 + $0xf8] sm:$0xff]
      %v206 = vld [vmem:[%s1] sm:$0xf]
      %v207 = vld [vmem:[%s2] sm:$0x1]
      %v209 = vperm.slane %v207, 0
      %vm211 = vcmask 31744
      %v213 = vsel %vm211, %v174, 0
      %v216 = vsel %vm211, %v175, 0
      %v219 = vsel %vm211, %v176, 0
      %v222 = vsel %vm211, %v177, 0
      %v225 = vsel %vm211, %v178, 0
      %v228 = vsel %vm211, %v179, 0
      %v231 = vsel %vm211, %v180, 0
      %v234 = vsel %vm211, %v181, 0
      %v237 = vsel %vm211, %v182, 0
      %v240 = vsel %vm211, %v183, 0
      %v243 = vsel %vm211, %v184, 0
      %v246 = vsel %vm211, %v185, 0
      %v249 = vsel %vm211, %v186, 0
      %v252 = vsel %vm211, %v187, 0
      %v255 = vsel %vm211, %v188, 0
      %v258 = vsel %vm211, %v189, 0
      %v261 = vsel %vm211, %v190, 0
      %v264 = vsel %vm211, %v191, 0
      %v267 = vsel %vm211, %v192, 0
      %v270 = vsel %vm211, %v193, 0
      %v273 = vsel %vm211, %v194, 0
      %v276 = vsel %vm211, %v195, 0
      %v279 = vsel %vm211, %v196, 0
      %v282 = vsel %vm211, %v197, 0
      %v285 = vsel %vm211, %v198, 0
      %v288 = vsel %vm211, %v199, 0
      %v291 = vsel %vm211, %v200, 0
      %v294 = vsel %vm211, %v201, 0
      %v297 = vsel %vm211, %v202, 0
      %v300 = vsel %vm211, %v203, 0
      %v303 = vsel %vm211, %v204, 0
      %v306 = vsel %vm211, %v205, 0
      %vm308 = vcmask 1043456
      %v310 = vsel %vm308, %v206, 0
      %312 = vmatpush.msra.mxu0 0.0
      %313 = vmatpush.msra.mxu0 0.0
      %314 = vmatpush.msra.mxu0 0.0
      %315 = vmatpush.msra.mxu0 0.0
      %316 = vmatpush.msra.mxu0 0.0
      %317 = vmatpush.msra.mxu0 0.0
      %318 = vmatpush.msra.mxu0 0.0
      %319 = vmatpush.msra.mxu0 0.0
      %320 = vmatpush.msra.mxu0 0.0
      %321 = vmatpush.msra.mxu0 0.0
      %322 = vmatpush.msra.mxu0 0.0
      %323 = vmatpush.msra.mxu0 0.0
      %324 = vmatpush.msra.mxu0 0.0
      %325 = vmatpush.msra.mxu0 0.0
      %326 = vmatpush.msra.mxu0 0.0
      %327 = vmatpush.msra.mxu0 %v310
      %328 = vmatmul.f32.gmra.mxu0 %v213
      %v329 = vpop.f32.mrf.mxu0
      %v330 = vadd.f32 %v209, %v329
      %331 = vmatmul.f32.gmra.mxu0 %v216
      %v332 = vpop.f32.mrf.mxu0
      %v333 = vadd.f32 %v209, %v332
      %334 = vmatmul.f32.gmra.mxu0 %v219
      %v335 = vpop.f32.mrf.mxu0
      %v336 = vadd.f32 %v209, %v335
      %337 = vmatmul.f32.gmra.mxu0 %v222
      %v338 = vpop.f32.mrf.mxu0
      %v339 = vadd.f32 %v209, %v338
      %340 = vmatmul.f32.gmra.mxu0 %v225
      %v341 = vpop.f32.mrf.mxu0
      %v342 = vadd.f32 %v209, %v341
      %343 = vmatmul.f32.gmra.mxu0 %v228
      %v344 = vpop.f32.mrf.mxu0
      %v345 = vadd.f32 %v209, %v344
      %346 = vmatmul.f32.gmra.mxu0 %v231
      %v347 = vpop.f32.mrf.mxu0
      %v348 = vadd.f32 %v209, %v347
      %349 = vmatmul.f32.gmra.mxu0 %v234
      %v350 = vpop.f32.mrf.mxu0
      %v351 = vadd.f32 %v209, %v350
      %352 = vmatmul.f32.gmra.mxu0 %v237
      %v353 = vpop.f32.mrf.mxu0
      %v354 = vadd.f32 %v209, %v353
      %355 = vmatmul.f32.gmra.mxu0 %v240
      %v356 = vpop.f32.mrf.mxu0
      %v357 = vadd.f32 %v209, %v356
      %358 = vmatmul.f32.gmra.mxu0 %v243
      %v359 = vpop.f32.mrf.mxu0
      %v360 = vadd.f32 %v209, %v359
      %361 = vmatmul.f32.gmra.mxu0 %v246
      %v362 = vpop.f32.mrf.mxu0
      %v363 = vadd.f32 %v209, %v362
      %364 = vmatmul.f32.gmra.mxu0 %v249
      %v365 = vpop.f32.mrf.mxu0
      %v366 = vadd.f32 %v209, %v365
      %367 = vmatmul.f32.gmra.mxu0 %v252
      %v368 = vpop.f32.mrf.mxu0
      %v369 = vadd.f32 %v209, %v368
      %370 = vmatmul.f32.gmra.mxu0 %v255
      %v371 = vpop.f32.mrf.mxu0
      %v372 = vadd.f32 %v209, %v371
      %373 = vmatmul.f32.gmra.mxu0 %v258
      %v374 = vpop.f32.mrf.mxu0
      %v375 = vadd.f32 %v209, %v374
      %376 = vmatmul.f32.gmra.mxu0 %v261
      %v377 = vpop.f32.mrf.mxu0
      %v378 = vadd.f32 %v209, %v377
      %379 = vmatmul.f32.gmra.mxu0 %v264
      %v380 = vpop.f32.mrf.mxu0
      %v381 = vadd.f32 %v209, %v380
      %382 = vmatmul.f32.gmra.mxu0 %v267
      %v383 = vpop.f32.mrf.mxu0
      %v384 = vadd.f32 %v209, %v383
      %385 = vmatmul.f32.gmra.mxu0 %v270
      %v386 = vpop.f32.mrf.mxu0
      %v387 = vadd.f32 %v209, %v386
      %388 = vmatmul.f32.gmra.mxu0 %v273
      %v389 = vpop.f32.mrf.mxu0
      %v390 = vadd.f32 %v209, %v389
      %391 = vmatmul.f32.gmra.mxu0 %v276
      %v392 = vpop.f32.mrf.mxu0
      %v393 = vadd.f32 %v209, %v392
      %394 = vmatmul.f32.gmra.mxu0 %v279
      %v395 = vpop.f32.mrf.mxu0
      %v396 = vadd.f32 %v209, %v395
      %397 = vmatmul.f32.gmra.mxu0 %v282
      %v398 = vpop.f32.mrf.mxu0
      %v399 = vadd.f32 %v209, %v398
      %400 = vmatmul.f32.gmra.mxu0 %v285
      %v401 = vpop.f32.mrf.mxu0
      %v402 = vadd.f32 %v209, %v401
      %403 = vmatmul.f32.gmra.mxu0 %v288
      %v404 = vpop.f32.mrf.mxu0
      %v405 = vadd.f32 %v209, %v404
      %406 = vmatmul.f32.gmra.mxu0 %v291
      %v407 = vpop.f32.mrf.mxu0
      %v408 = vadd.f32 %v209, %v407
      %409 = vmatmul.f32.gmra.mxu0 %v294
      %v410 = vpop.f32.mrf.mxu0
      %v411 = vadd.f32 %v209, %v410
      %412 = vmatmul.f32.gmra.mxu0 %v297
      %v413 = vpop.f32.mrf.mxu0
      %v414 = vadd.f32 %v209, %v413
      %415 = vmatmul.f32.gmra.mxu0 %v300
      %v416 = vpop.f32.mrf.mxu0
      %v417 = vadd.f32 %v209, %v416
      %418 = vmatmul.f32.gmra.mxu0 %v303
      %v419 = vpop.f32.mrf.mxu0
      %v420 = vadd.f32 %v209, %v419
      %421 = vmatmul.f32.gmra.mxu0 %v306
      %v422 = vpop.f32.mrf.mxu0
      %v423 = vadd.f32 %v209, %v422
      %424 = vdwg.mxu0
      %v425 = vmax.f32 %v330, 0.0
      %v426 = vmax.f32 %v333, 0.0
      %v427 = vmax.f32 %v336, 0.0
      %v428 = vmax.f32 %v339, 0.0
      %v429 = vmax.f32 %v342, 0.0
      %v430 = vmax.f32 %v345, 0.0
      %v431 = vmax.f32 %v348, 0.0
      %v432 = vmax.f32 %v351, 0.0
      %v433 = vmax.f32 %v354, 0.0
      %v434 = vmax.f32 %v357, 0.0
      %v435 = vmax.f32 %v360, 0.0
      %v436 = vmax.f32 %v363, 0.0
      %v437 = vmax.f32 %v366, 0.0
      %v438 = vmax.f32 %v369, 0.0
      %v439 = vmax.f32 %v372, 0.0
      %v440 = vmax.f32 %v375, 0.0
      %v441 = vmax.f32 %v378, 0.0
      %v442 = vmax.f32 %v381, 0.0
      %v443 = vmax.f32 %v384, 0.0
      %v444 = vmax.f32 %v387, 0.0
      %v445 = vmax.f32 %v390, 0.0
      %v446 = vmax.f32 %v393, 0.0
      %v447 = vmax.f32 %v396, 0.0
      %v448 = vmax.f32 %v399, 0.0
      %v449 = vmax.f32 %v402, 0.0
      %v450 = vmax.f32 %v405, 0.0
      %v451 = vmax.f32 %v408, 0.0
      %v452 = vmax.f32 %v411, 0.0
      %v453 = vmax.f32 %v414, 0.0
      %v454 = vmax.f32 %v417, 0.0
      %v455 = vmax.f32 %v420, 0.0
      %v456 = vmax.f32 %v423, 0.0
      %vm457 = vcmask 326656
      %458 = vst.msk [vmem:[%s172] sm:$0xff] %vm457, %v425
      %459 = vst.msk [vmem:[%s172 + $0x8] sm:$0xff] %vm457, %v426
      %460 = vst.msk [vmem:[%s172 + $0x10] sm:$0xff] %vm457, %v427
      %461 = vst.msk [vmem:[%s172 + $0x18] sm:$0xff] %vm457, %v428
      %462 = vst.msk [vmem:[%s172 + $0x20] sm:$0xff] %vm457, %v429
      %463 = vst.msk [vmem:[%s172 + $0x28] sm:$0xff] %vm457, %v430
      %464 = vst.msk [vmem:[%s172 + $0x30] sm:$0xff] %vm457, %v431
      %465 = vst.msk [vmem:[%s172 + $0x38] sm:$0xff] %vm457, %v432
      %466 = vst.msk [vmem:[%s172 + $0x40] sm:$0xff] %vm457, %v433
      %467 = vst.msk [vmem:[%s172 + $0x48] sm:$0xff] %vm457, %v434
      %468 = vst.msk [vmem:[%s172 + $0x50] sm:$0xff] %vm457, %v435
      %469 = vst.msk [vmem:[%s172 + $0x58] sm:$0xff] %vm457, %v436
      %470 = vst.msk [vmem:[%s172 + $0x60] sm:$0xff] %vm457, %v437
      %471 = vst.msk [vmem:[%s172 + $0x68] sm:$0xff] %vm457, %v438
      %472 = vst.msk [vmem:[%s172 + $0x70] sm:$0xff] %vm457, %v439
      %473 = vst.msk [vmem:[%s172 + $0x78] sm:$0xff] %vm457, %v440
      %474 = vst.msk [vmem:[%s172 + $0x80] sm:$0xff] %vm457, %v441
      %475 = vst.msk [vmem:[%s172 + $0x88] sm:$0xff] %vm457, %v442
      %476 = vst.msk [vmem:[%s172 + $0x90] sm:$0xff] %vm457, %v443
      %477 = vst.msk [vmem:[%s172 + $0x98] sm:$0xff] %vm457, %v444
      %478 = vst.msk [vmem:[%s172 + $0xa0] sm:$0xff] %vm457, %v445
      %479 = vst.msk [vmem:[%s172 + $0xa8] sm:$0xff] %vm457, %v446
      %480 = vst.msk [vmem:[%s172 + $0xb0] sm:$0xff] %vm457, %v447
      %481 = vst.msk [vmem:[%s172 + $0xb8] sm:$0xff] %vm457, %v448
      %482 = vst.msk [vmem:[%s172 + $0xc0] sm:$0xff] %vm457, %v449
      %483 = vst.msk [vmem:[%s172 + $0xc8] sm:$0xff] %vm457, %v450
      %484 = vst.msk [vmem:[%s172 + $0xd0] sm:$0xff] %vm457, %v451
      %485 = vst.msk [vmem:[%s172 + $0xd8] sm:$0xff] %vm457, %v452
      %486 = vst.msk [vmem:[%s172 + $0xe0] sm:$0xff] %vm457, %v453
      %487 = vst.msk [vmem:[%s172 + $0xe8] sm:$0xff] %vm457, %v454
      %488 = vst.msk [vmem:[%s172 + $0xf0] sm:$0xff] %vm457, %v455
      %489 = vst.msk [vmem:[%s172 + $0xf8] sm:$0xff] %vm457, %v456
      %s490 = smul.u32 32, %s14
      %p491 = scmp.lt.s32.totalorder %s490, 63
      %s492 = scalar_select %p491, %s490, 63
      %s493 = smul.addr %s492, 8
      %s494 = scalar_lea.vmem %s3, %s493
      // Predicated region
      $region33: #{dilated_inception_block.2} parent=31 // pred_check
        %p495 = pneg %p100
      $region34: #{dilated_inception_block.2} parent=31 // pred_check_branch
        %497 = sbr.rel (%p495) target = $region36
      $region35: #{dilated_inception_block.2} parent=31 // pred_region
        %s498 = smul.u32 32, %s14
      $region36: #{dilated_inception_block.2} parent=31 // pred_fallthru
        _
    $region32: #{dilated_inception_block.2} parent=5 // pred_fallthru
      _
    %p499 = scmp.le.s32.totalorder 2, %s9
    // Predicated region
    $region37: #{dilated_inception_block.2} parent=5 // pred_check
      %p500 = pneg %p499
    $region38: #{dilated_inception_block.2} parent=5 // pred_check_branch
      %502 = sbr.rel (%p500) target = $region40
    $region39: #{dilated_inception_block.2} parent=5 // pred_region
      %s503 = ssub.s32 %s9, 2
      // Predicated region
      $region41: #{dilated_inception_block.2} parent=39 // pred_check
        %p504 = pneg %p106
      $region42: #{dilated_inception_block.2} parent=39 // pred_check_branch
        %506 = sbr.rel (%p504) target = $region44
      $region43: #{dilated_inception_block.2} parent=39 // pred_region
        %s507 = smul.u32 32, %s15
        %p508 = scmp.lt.s32.totalorder %s507, 63
        %s509 = scalar_select %p508, %s507, 63
        %s510 = smul.addr %s509, 8
        %s511 = scalar_lea.vmem %s3, %s510
      $region44: #{dilated_inception_block.2} parent=39 // pred_fallthru
        _
    $region40: #{dilated_inception_block.2} parent=5 // pred_fallthru
      _
  $region6: #{dilated_inception_block.2} parent=0 // loop_footer
    %s13 = sadd.s32 1, %s9
  $region7: #{dilated_inception_block.2} parent=0 // loop_footer_branch
    %8 = sbr.rel target = $region3
  $region8: #{dilated_inception_block.2} parent=0 // loop_exit
    _

// kernel: dilated_inception_block.3
$region0: #{dilated_inception_block.3}
  #allocation0 [shape = 'u32[]', space=smem, size = 0x4, offset = 0x4, fixed_abs, tag = 'smem constant byte address 0x4 - core index']
  #allocation1 [shape = 'u32[72,128]{1,0:T(1,128)}', space=vmem, size = 0x9000, scoped, tag = 'internal scratch']
  %s0 = inlined_call_operand.vmem [shape: f32[512,40], index: 0, kind: input, shape index: {}]
  %s1 = inlined_call_operand.vmem [shape: f32[512,72], index: 1, kind: input, shape index: {}]
  %s2 = inlined_call_operand.vmem [shape: f32[512,72], index: 2, kind: input, shape index: {}]
  %s3 = inlined_call_operand.vmem [shape: f32[512,72], index: 3, kind: input, shape index: {}]
  %s4 = inlined_call_operand.vmem [shape: f32[72,8], index: 4, kind: input, shape index: {}]
  %s5 = inlined_call_operand.vmem [shape: f32[72,8], index: 5, kind: input, shape index: {}]
  %s6 = inlined_call_operand.vmem [shape: f32[72,8], index: 6, kind: input, shape index: {}]
  %s7 = inlined_call_operand.vmem [shape: f32[3,8], index: 7, kind: input, shape index: {}]
  %s8 = inlined_call_operand.vmem [shape: f32[32,8], index: 8, kind: input, shape index: {}]
  %s9 = inlined_call_operand.vmem [shape: f32[1,8], index: 9, kind: input, shape index: {}]
  %s10 = inlined_call_operand.vmem [shape: f32[512,8], index: 10, kind: output, shape index: {}]
  %s11 = sld [smem:[#allocation0]]
  $region73: #{dilated_inception_block.3} parent=0
    _
  %s13 = ssub.s32 1, %s11
  %s14 = scalar_select 0, %s13, %s11
  loop: start=0, step=1, limit=4
  $region2: #{dilated_inception_block.3} parent=0 // loop_pre_header
    _
  $region3: #{dilated_inception_block.3} parent=0 // loop_header
    %s16 = sphi 0, %s20
    %p17 = scmp.ge.s32.totalorder %s16, 4
    %s26 = sphi 0, %s28
    %s29 = sphi 0, %s26
    %s30 = sphi 0, %s29
    %s46 = sphi 0, %s30
    %s52 = sphi 0, %s54
    %s55 = sphi 0, %s52
    %s56 = sphi 0, %s55
    %s72 = sphi 0, %s56
    %s78 = sphi 0, %s80
    %s81 = sphi 0, %s78
    %s82 = sphi 0, %s81
    %s98 = sphi 0, %s82
    %s104 = sphi 0, %s106
    %s107 = sphi 0, %s104
    %s108 = sphi 0, %s107
    %s124 = sphi 0, %s108
    %s128 = sphi 0, %s128
    %s130 = sphi 0, %s128
    %s131 = sphi 0, %s130
    %s145 = sphi 0, %s131
    %s149 = sphi 0, %s149
    %s151 = sphi 0, %s149
    %s152 = sphi 0, %s151
    %s166 = sphi 0, %s152
    %s170 = sphi 0, %s170
    %s172 = sphi 0, %s170
    %s173 = sphi 0, %s172
    %s187 = sphi 0, %s173
    %s191 = sphi 0, %s191
    %s193 = sphi 0, %s191
    %s194 = sphi 0, %s193
    %s208 = sphi 0, %s194
    %s212 = sphi 0, %s212
    %s214 = sphi 0, %s212
    %s215 = sphi 0, %s214
    %s229 = sphi 0, %s215
    %s233 = sphi 0, %s233
    %s235 = sphi 0, %s233
    %s236 = sphi 0, %s235
    %s250 = sphi 0, %s236
    %s256 = sphi 0, %s258
    %s259 = sphi 0, %s256
    %s260 = sphi 0, %s259
    %s276 = sphi 0, %s260
  $region4: #{dilated_inception_block.3} parent=0 // loop_header_branch
    %19 = sbr.rel (%p17) target = $region8
  $region5: #{dilated_inception_block.3} parent=0 // loop_body
    %s21 = ssub.s32 %s16, 1
    %s22 = ssub.s32 %s16, 2
    %s23 = sadd.s32 %s16, 1
    %s24 = ssub.s32 %s16, %s23
    %p25 = scmp.eq.s32.totalorder %s24, 0
    %s27 = sadd.s32 %s26, 1
    %s28 = scalar_select %p25, %s26, %s27
    %p31 = pneg %p25
    %p32 = scmp.eq.s32.totalorder %s16, 1
    %p33 = por %p31, %p32
    %p34 = scmp.ne.s32.totalorder %s26, %s29
    %p35 = scmp.eq.s32.totalorder %s16, 0
    %p36 = por %p34, %p35
    %p37 = scmp.ne.s32.totalorder %s26, %s29
    %p38 = scmp.eq.s32.totalorder %s21, 1
    %p39 = por %p37, %p38
    %p40 = scmp.ne.s32.totalorder %s29, %s30
    %p41 = scmp.eq.s32.totalorder %s21, 0
    %p42 = por %p40, %p41
    %p43 = scmp.ne.s32.totalorder %s29, %s30
    %p44 = scmp.eq.s32.totalorder %s22, 1
    %p45 = por %p43, %p44
    %p47 = scmp.ne.s32.totalorder %s30, %s46
    %p48 = scmp.eq.s32.totalorder %s22, 0
    %p49 = por %p47, %p48
    %s50 = ssub.s32 %s16, %s23
    %p51 = scmp.eq.s32.totalorder %s50, 0
    %s53 = sadd.s32 %s52, 1
    %s54 = scalar_select %p51, %s52, %s53
    %p57 = pneg %p51
    %p58 = scmp.eq.s32.totalorder %s16, 1
    %p59 = por %p57, %p58
    %p60 = scmp.ne.s32.totalorder %s52, %s55
    %p61 = scmp.eq.s32.totalorder %s16, 0
    %p62 = por %p60, %p61
    %p63 = scmp.ne.s32.totalorder %s52, %s55
    %p64 = scmp.eq.s32.totalorder %s21, 1
    %p65 = por %p63, %p64
    %p66 = scmp.ne.s32.totalorder %s55, %s56
    %p67 = scmp.eq.s32.totalorder %s21, 0
    %p68 = por %p66, %p67
    %p69 = scmp.ne.s32.totalorder %s55, %s56
    %p70 = scmp.eq.s32.totalorder %s22, 1
    %p71 = por %p69, %p70
    %p73 = scmp.ne.s32.totalorder %s56, %s72
    %p74 = scmp.eq.s32.totalorder %s22, 0
    %p75 = por %p73, %p74
    %s76 = ssub.s32 %s16, %s23
    %p77 = scmp.eq.s32.totalorder %s76, 0
    %s79 = sadd.s32 %s78, 1
    %s80 = scalar_select %p77, %s78, %s79
    %p83 = pneg %p77
    %p84 = scmp.eq.s32.totalorder %s16, 1
    %p85 = por %p83, %p84
    %p86 = scmp.ne.s32.totalorder %s78, %s81
    %p87 = scmp.eq.s32.totalorder %s16, 0
    %p88 = por %p86, %p87
    %p89 = scmp.ne.s32.totalorder %s78, %s81
    %p90 = scmp.eq.s32.totalorder %s21, 1
    %p91 = por %p89, %p90
    %p92 = scmp.ne.s32.totalorder %s81, %s82
    %p93 = scmp.eq.s32.totalorder %s21, 0
    %p94 = por %p92, %p93
    %p95 = scmp.ne.s32.totalorder %s81, %s82
    %p96 = scmp.eq.s32.totalorder %s22, 1
    %p97 = por %p95, %p96
    %p99 = scmp.ne.s32.totalorder %s82, %s98
    %p100 = scmp.eq.s32.totalorder %s22, 0
    %p101 = por %p99, %p100
    %s102 = ssub.s32 %s16, %s23
    %p103 = scmp.eq.s32.totalorder %s102, 0
    %s105 = sadd.s32 %s104, 1
    %s106 = scalar_select %p103, %s104, %s105
    %p109 = pneg %p103
    %p110 = scmp.eq.s32.totalorder %s16, 1
    %p111 = por %p109, %p110
    %p112 = scmp.ne.s32.totalorder %s104, %s107
    %p113 = scmp.eq.s32.totalorder %s16, 0
    %p114 = por %p112, %p113
    %p115 = scmp.ne.s32.totalorder %s104, %s107
    %p116 = scmp.eq.s32.totalorder %s21, 1
    %p117 = por %p115, %p116
    %p118 = scmp.ne.s32.totalorder %s107, %s108
    %p119 = scmp.eq.s32.totalorder %s21, 0
    %p120 = por %p118, %p119
    %p121 = scmp.ne.s32.totalorder %s107, %s108
    %p122 = scmp.eq.s32.totalorder %s22, 1
    %p123 = por %p121, %p122
    %p125 = scmp.ne.s32.totalorder %s108, %s124
    %p126 = scmp.eq.s32.totalorder %s22, 0
    %p127 = por %p125, %p126
    %s129 = sadd.s32 %s128, 1
    %p132 = scmp.eq.s32.totalorder %s16, 1
    %p133 = scmp.ne.s32.totalorder %s128, %s130
    %p134 = scmp.eq.s32.totalorder %s16, 0
    %p135 = por %p133, %p134
    %p136 = scmp.ne.s32.totalorder %s128, %s130
    %p137 = scmp.eq.s32.totalorder %s21, 1
    %p138 = por %p136, %p137
    %p139 = scmp.ne.s32.totalorder %s130, %s131
    %p140 = scmp.eq.s32.totalorder %s21, 0
    %p141 = por %p139, %p140
    %p142 = scmp.ne.s32.totalorder %s130, %s131
    %p143 = scmp.eq.s32.totalorder %s22, 1
    %p144 = por %p142, %p143
    %p146 = scmp.ne.s32.totalorder %s131, %s145
    %p147 = scmp.eq.s32.totalorder %s22, 0
    %p148 = por %p146, %p147
    %s150 = sadd.s32 %s149, 1
    %p153 = scmp.eq.s32.totalorder %s16, 1
    %p154 = scmp.ne.s32.totalorder %s149, %s151
    %p155 = scmp.eq.s32.totalorder %s16, 0
    %p156 = por %p154, %p155
    %p157 = scmp.ne.s32.totalorder %s149, %s151
    %p158 = scmp.eq.s32.totalorder %s21, 1
    %p159 = por %p157, %p158
    %p160 = scmp.ne.s32.totalorder %s151, %s152
    %p161 = scmp.eq.s32.totalorder %s21, 0
    %p162 = por %p160, %p161
    %p163 = scmp.ne.s32.totalorder %s151, %s152
    %p164 = scmp.eq.s32.totalorder %s22, 1
    %p165 = por %p163, %p164
    %p167 = scmp.ne.s32.totalorder %s152, %s166
    %p168 = scmp.eq.s32.totalorder %s22, 0
    %p169 = por %p167, %p168
    %s171 = sadd.s32 %s170, 1
    %p174 = scmp.eq.s32.totalorder %s16, 1
    %p175 = scmp.ne.s32.totalorder %s170, %s172
    %p176 = scmp.eq.s32.totalorder %s16, 0
    %p177 = por %p175, %p176
    %p178 = scmp.ne.s32.totalorder %s170, %s172
    %p179 = scmp.eq.s32.totalorder %s21, 1
    %p180 = por %p178, %p179
    %p181 = scmp.ne.s32.totalorder %s172, %s173
    %p182 = scmp.eq.s32.totalorder %s21, 0
    %p183 = por %p181, %p182
    %p184 = scmp.ne.s32.totalorder %s172, %s173
    %p185 = scmp.eq.s32.totalorder %s22, 1
    %p186 = por %p184, %p185
    %p188 = scmp.ne.s32.totalorder %s173, %s187
    %p189 = scmp.eq.s32.totalorder %s22, 0
    %p190 = por %p188, %p189
    %s192 = sadd.s32 %s191, 1
    %p195 = scmp.eq.s32.totalorder %s16, 1
    %p196 = scmp.ne.s32.totalorder %s191, %s193
    %p197 = scmp.eq.s32.totalorder %s16, 0
    %p198 = por %p196, %p197
    %p199 = scmp.ne.s32.totalorder %s191, %s193
    %p200 = scmp.eq.s32.totalorder %s21, 1
    %p201 = por %p199, %p200
    %p202 = scmp.ne.s32.totalorder %s193, %s194
    %p203 = scmp.eq.s32.totalorder %s21, 0
    %p204 = por %p202, %p203
    %p205 = scmp.ne.s32.totalorder %s193, %s194
    %p206 = scmp.eq.s32.totalorder %s22, 1
    %p207 = por %p205, %p206
    %p209 = scmp.ne.s32.totalorder %s194, %s208
    %p210 = scmp.eq.s32.totalorder %s22, 0
    %p211 = por %p209, %p210
    %s213 = sadd.s32 %s212, 1
    %p216 = scmp.eq.s32.totalorder %s16, 1
    %p217 = scmp.ne.s32.totalorder %s212, %s214
    %p218 = scmp.eq.s32.totalorder %s16, 0
    %p219 = por %p217, %p218
    %p220 = scmp.ne.s32.totalorder %s212, %s214
    %p221 = scmp.eq.s32.totalorder %s21, 1
    %p222 = por %p220, %p221
    %p223 = scmp.ne.s32.totalorder %s214, %s215
    %p224 = scmp.eq.s32.totalorder %s21, 0
    %p225 = por %p223, %p224
    %p226 = scmp.ne.s32.totalorder %s214, %s215
    %p227 = scmp.eq.s32.totalorder %s22, 1
    %p228 = por %p226, %p227
    %p230 = scmp.ne.s32.totalorder %s215, %s229
    %p231 = scmp.eq.s32.totalorder %s22, 0
    %p232 = por %p230, %p231
    %s234 = sadd.s32 %s233, 1
    %p237 = scmp.eq.s32.totalorder %s16, 1
    %p238 = scmp.ne.s32.totalorder %s233, %s235
    %p239 = scmp.eq.s32.totalorder %s16, 0
    %p240 = por %p238, %p239
    %p241 = scmp.ne.s32.totalorder %s233, %s235
    %p242 = scmp.eq.s32.totalorder %s21, 1
    %p243 = por %p241, %p242
    %p244 = scmp.ne.s32.totalorder %s235, %s236
    %p245 = scmp.eq.s32.totalorder %s21, 0
    %p246 = por %p244, %p245
    %p247 = scmp.ne.s32.totalorder %s235, %s236
    %p248 = scmp.eq.s32.totalorder %s22, 1
    %p249 = por %p247, %p248
    %p251 = scmp.ne.s32.totalorder %s236, %s250
    %p252 = scmp.eq.s32.totalorder %s22, 0
    %p253 = por %p251, %p252
    %s254 = ssub.s32 %s16, %s23
    %p255 = scmp.eq.s32.totalorder %s254, 0
    %s257 = sadd.s32 %s256, 1
    %s258 = scalar_select %p255, %s256, %s257
    %p261 = pneg %p255
    %p262 = scmp.eq.s32.totalorder %s16, 1
    %p263 = por %p261, %p262
    %p264 = scmp.ne.s32.totalorder %s256, %s259
    %p265 = scmp.eq.s32.totalorder %s16, 0
    %p266 = por %p264, %p265
    %p267 = scmp.ne.s32.totalorder %s256, %s259
    %p268 = scmp.eq.s32.totalorder %s21, 1
    %p269 = por %p267, %p268
    %p270 = scmp.ne.s32.totalorder %s259, %s260
    %p271 = scmp.eq.s32.totalorder %s21, 0
    %p272 = por %p270, %p271
    %p273 = scmp.ne.s32.totalorder %s259, %s260
    %p274 = scmp.eq.s32.totalorder %s22, 1
    %p275 = por %p273, %p274
    %p277 = scmp.ne.s32.totalorder %s260, %s276
    %p278 = scmp.eq.s32.totalorder %s22, 0
    %p279 = por %p277, %p278
    %p280 = scmp.le.s32.totalorder 1, %s16
    %p281 = scmp.lt.s32.totalorder %s16, 3
    %p282 = pnand %p280, %p281
    %p283 = pneg %p282
    // Predicated region
    $region9: #{dilated_inception_block.3} parent=5 // pred_check
      _
    $region10: #{dilated_inception_block.3} parent=5 // pred_check_branch
      %285 = sbr.rel (%p282) target = $region12
    $region11: #{dilated_inception_block.3} parent=5 // pred_region
      %s286 = ssub.s32 %s16, 1
      // Predicated region
      $region13: #{dilated_inception_block.3} parent=11 // pred_check
        %p287 = pneg %p141
      $region14: #{dilated_inception_block.3} parent=11 // pred_check_branch
        %289 = sbr.rel (%p287) target = $region16
      $region15: #{dilated_inception_block.3} parent=11 // pred_region
        _
      $region16: #{dilated_inception_block.3} parent=11 // pred_fallthru
        _
      // Predicated region
      $region17: #{dilated_inception_block.3} parent=11 // pred_check
        %p290 = pneg %p162
      $region18: #{dilated_inception_block.3} parent=11 // pred_check_branch
        %292 = sbr.rel (%p290) target = $region20
      $region19: #{dilated_inception_block.3} parent=11 // pred_region
        _
      $region20: #{dilated_inception_block.3} parent=11 // pred_fallthru
        _
      // Predicated region
      $region21: #{dilated_inception_block.3} parent=11 // pred_check
        %p293 = pneg %p183
      $region22: #{dilated_inception_block.3} parent=11 // pred_check_branch
        %295 = sbr.rel (%p293) target = $region24
      $region23: #{dilated_inception_block.3} parent=11 // pred_region
        _
      $region24: #{dilated_inception_block.3} parent=11 // pred_fallthru
        _
      // Predicated region
      $region25: #{dilated_inception_block.3} parent=11 // pred_check
        %p296 = pneg %p204
      $region26: #{dilated_inception_block.3} parent=11 // pred_check_branch
        %298 = sbr.rel (%p296) target = $region28
      $region27: #{dilated_inception_block.3} parent=11 // pred_region
        _
      $region28: #{dilated_inception_block.3} parent=11 // pred_fallthru
        _
      // Predicated region
      $region29: #{dilated_inception_block.3} parent=11 // pred_check
        %p299 = pneg %p225
      $region30: #{dilated_inception_block.3} parent=11 // pred_check_branch
        %301 = sbr.rel (%p299) target = $region32
      $region31: #{dilated_inception_block.3} parent=11 // pred_region
        _
      $region32: #{dilated_inception_block.3} parent=11 // pred_fallthru
        _
      // Predicated region
      $region33: #{dilated_inception_block.3} parent=11 // pred_check
        %p302 = pneg %p246
      $region34: #{dilated_inception_block.3} parent=11 // pred_check_branch
        %304 = sbr.rel (%p302) target = $region36
      $region35: #{dilated_inception_block.3} parent=11 // pred_region
        _
      $region36: #{dilated_inception_block.3} parent=11 // pred_fallthru
        _
    $region12: #{dilated_inception_block.3} parent=5 // pred_fallthru
      _
    %p305 = scmp.lt.s32.totalorder %s16, 2
    // Predicated region
    $region37: #{dilated_inception_block.3} parent=5 // pred_check
      %p306 = pneg %p305
    $region38: #{dilated_inception_block.3} parent=5 // pred_check_branch
      %308 = sbr.rel (%p306) target = $region40
    $region39: #{dilated_inception_block.3} parent=5 // pred_region
      // Predicated region
      $region41: #{dilated_inception_block.3} parent=39 // pred_check
        %p309 = pneg %p36
      $region42: #{dilated_inception_block.3} parent=39 // pred_check_branch
        %311 = sbr.rel (%p309) target = $region44
      $region43: #{dilated_inception_block.3} parent=39 // pred_region
        %s312 = smul.u32 32, %s16
        %p313 = scmp.lt.s32.totalorder %s312, 63
        %s314 = scalar_select %p313, %s312, 63
        %s315 = smul.addr %s314, 8
        %s316 = scalar_lea.vmem %s0, %s315
        %s317 = smul.u32 32, %s16
      $region44: #{dilated_inception_block.3} parent=39 // pred_fallthru
        _
      // Predicated region
      $region45: #{dilated_inception_block.3} parent=39 // pred_check
        %p318 = pneg %p62
      $region46: #{dilated_inception_block.3} parent=39 // pred_check_branch
        %320 = sbr.rel (%p318) target = $region48
      $region47: #{dilated_inception_block.3} parent=39 // pred_region
        %s321 = smul.u32 32, %s16
        %p322 = scmp.lt.s32.totalorder %s321, 63
        %s323 = scalar_select %p322, %s321, 63
        %s324 = smul.addr %s323, 8
        %s325 = scalar_lea.vmem %s1, %s324
        %s326 = smul.u32 32, %s16
      $region48: #{dilated_inception_block.3} parent=39 // pred_fallthru
        _
      // Predicated region
      $region49: #{dilated_inception_block.3} parent=39 // pred_check
        %p327 = pneg %p88
      $region50: #{dilated_inception_block.3} parent=39 // pred_check_branch
        %329 = sbr.rel (%p327) target = $region52
      $region51: #{dilated_inception_block.3} parent=39 // pred_region
        %s330 = smul.u32 32, %s16
        %p331 = scmp.lt.s32.totalorder %s330, 63
        %s332 = scalar_select %p331, %s330, 63
        %s333 = smul.addr %s332, 8
        %s334 = scalar_lea.vmem %s2, %s333
        %s335 = smul.u32 32, %s16
      $region52: #{dilated_inception_block.3} parent=39 // pred_fallthru
        _
      // Predicated region
      $region53: #{dilated_inception_block.3} parent=39 // pred_check
        %p336 = pneg %p114
      $region54: #{dilated_inception_block.3} parent=39 // pred_check_branch
        %338 = sbr.rel (%p336) target = $region56
      $region55: #{dilated_inception_block.3} parent=39 // pred_region
        %s339 = smul.u32 32, %s16
        %p340 = scmp.lt.s32.totalorder %s339, 63
        %s341 = scalar_select %p340, %s339, 63
        %s342 = smul.addr %s341, 8
        %s343 = scalar_lea.vmem %s3, %s342
        %s344 = smul.u32 32, %s16
      $region56: #{dilated_inception_block.3} parent=39 // pred_fallthru
        _
    $region40: #{dilated_inception_block.3} parent=5 // pred_fallthru
      _
    %p345 = scmp.le.s32.totalorder 1, %s16
    %p346 = scmp.lt.s32.totalorder %s16, 3
    %p347 = pnand %p345, %p346
    %p348 = pneg %p347
    // Predicated region
    $region57: #{dilated_inception_block.3} parent=5 // pred_check
      _
    $region58: #{dilated_inception_block.3} parent=5 // pred_check_branch
      %350 = sbr.rel (%p347) target = $region60
    $region59: #{dilated_inception_block.3} parent=5 // pred_region
      %s351 = ssub.s32 %s16, 1
      %s352 = smul.u32 32, %s21
      %p353 = scmp.lt.s32.totalorder %s352, 63
      %s354 = scalar_select %p353, %s352, 63
      %s355 = smul.addr %s354, 8
      %s356 = scalar_lea.vmem %s0, %s355
      %p357 = pneg %p42
      %p358 = pneg %p39
      %s359 = smul.u32 32, %s21
      %p360 = scmp.lt.s32.totalorder %s359, 63
      %s361 = scalar_select %p360, %s359, 63
      %s362 = smul.addr %s361, 8
      %s363 = scalar_lea.vmem %s1, %s362
      %p364 = pneg %p68
      %p365 = pneg %p65
      %s366 = smul.u32 32, %s21
      %p367 = scmp.lt.s32.totalorder %s366, 63
      %s368 = scalar_select %p367, %s366, 63
      %s369 = smul.addr %s368, 8
      %s370 = scalar_lea.vmem %s2, %s369
      %p371 = pneg %p94
      %p372 = pneg %p91
      %s373 = smul.u32 32, %s21
      %p374 = scmp.lt.s32.totalorder %s373, 63
      %s375 = scalar_select %p374, %s373, 63
      %s376 = smul.addr %s375, 8
      %s377 = scalar_lea.vmem %s3, %s376
      %p378 = pneg %p120
      %p379 = pneg %p117
      %p380 = pneg %p141
      %p381 = pneg %p138
      %p382 = pneg %p162
      %p383 = pneg %p159
      %p384 = pneg %p183
      %p385 = pneg %p180
      %p386 = pneg %p204
      %p387 = pneg %p201
      %p388 = pneg %p225
      %p389 = pneg %p222
      %p390 = pneg %p246
      %p391 = pneg %p243
      %p392 = pneg %p272
      %p393 = pneg %p269
      %s394 = smul.u32 32, %s21
      %p395 = scmp.lt.s32.totalorder %s394, 63
      %s396 = scalar_select %p395, %s394, 63
      %s397 = smul.addr %s396, 8
      %s398 = scalar_lea.vmem %s10, %s397
      %s399 = smul.u32 32, %s21
      %p400 = scmp.lt.s32.totalorder %s399, 63
      %s401 = scalar_select %p400, %s399, 63
      %s402 = smul.addr %s401, 8
      %s403 = scalar_lea.vmem %s0, %s402
      %s404 = smul.u32 32, %s21
      %s405 = smul.u32 32, %s21
      %p406 = scmp.lt.s32.totalorder %s405, 63
      %s407 = scalar_select %p406, %s405, 63
      %s408 = smul.addr %s407, 8
      %s409 = scalar_lea.vmem %s1, %s408
      %s410 = smul.u32 32, %s21
      %s411 = smul.u32 32, %s21
      %p412 = scmp.lt.s32.totalorder %s411, 63
      %s413 = scalar_select %p412, %s411, 63
      %s414 = smul.addr %s413, 8
      %s415 = scalar_lea.vmem %s2, %s414
      %s416 = smul.u32 32, %s21
      %s417 = smul.u32 32, %s21
      %p418 = scmp.lt.s32.totalorder %s417, 63
      %s419 = scalar_select %p418, %s417, 63
      %s420 = smul.addr %s419, 8
      %s421 = scalar_lea.vmem %s3, %s420
      %s422 = smul.u32 32, %s21
      %s423 = smul.u32 32, %s21
      %p424 = scmp.lt.s32.totalorder %s423, 63
      %s425 = scalar_select %p424, %s423, 63
      %s426 = smul.addr %s425, 8
      %s427 = scalar_lea.vmem %s10, %s426
      %s428 = smul.u32 32, %s21
      %v429 = vld [vmem:[%s403] sm:$0xff]
      %v430 = vld [vmem:[%s403 + $0x8] sm:$0xff]
      %v431 = vld [vmem:[%s403 + $0x10] sm:$0xff]
      %v432 = vld [vmem:[%s403 + $0x18] sm:$0xff]
      %v433 = vld [vmem:[%s403 + $0x20] sm:$0xff]
      %v434 = vld [vmem:[%s403 + $0x28] sm:$0xff]
      %v435 = vld [vmem:[%s403 + $0x30] sm:$0xff]
      %v436 = vld [vmem:[%s403 + $0x38] sm:$0xff]
      %v437 = vld [vmem:[%s403 + $0x40] sm:$0xff]
      %v438 = vld [vmem:[%s403 + $0x48] sm:$0xff]
      %v439 = vld [vmem:[%s403 + $0x50] sm:$0xff]
      %v440 = vld [vmem:[%s403 + $0x58] sm:$0xff]
      %v441 = vld [vmem:[%s403 + $0x60] sm:$0xff]
      %v442 = vld [vmem:[%s403 + $0x68] sm:$0xff]
      %v443 = vld [vmem:[%s403 + $0x70] sm:$0xff]
      %v444 = vld [vmem:[%s403 + $0x78] sm:$0xff]
      %v445 = vld [vmem:[%s403 + $0x80] sm:$0xff]
      %v446 = vld [vmem:[%s403 + $0x88] sm:$0xff]
      %v447 = vld [vmem:[%s403 + $0x90] sm:$0xff]
      %v448 = vld [vmem:[%s403 + $0x98] sm:$0xff]
      %v449 = vld [vmem:[%s403 + $0xa0] sm:$0xff]
      %v450 = vld [vmem:[%s403 + $0xa8] sm:$0xff]
      %v451 = vld [vmem:[%s403 + $0xb0] sm:$0xff]
      %v452 = vld [vmem:[%s403 + $0xb8] sm:$0xff]
      %v453 = vld [vmem:[%s403 + $0xc0] sm:$0xff]
      %v454 = vld [vmem:[%s403 + $0xc8] sm:$0xff]
      %v455 = vld [vmem:[%s403 + $0xd0] sm:$0xff]
      %v456 = vld [vmem:[%s403 + $0xd8] sm:$0xff]
      %v457 = vld [vmem:[%s403 + $0xe0] sm:$0xff]
      %v458 = vld [vmem:[%s403 + $0xe8] sm:$0xff]
      %v459 = vld [vmem:[%s403 + $0xf0] sm:$0xff]
      %v460 = vld [vmem:[%s403 + $0xf8] sm:$0xff]
      %v461 = vld [vmem:[%s7] sm:$0x1]
      %v462 = vld [vmem:[%s409] sm:$0xff]
      %v463 = vld [vmem:[%s409 + $0x8] sm:$0xff]
      %v464 = vld [vmem:[%s409 + $0x10] sm:$0xff]
      %v465 = vld [vmem:[%s409 + $0x18] sm:$0xff]
      %v466 = vld [vmem:[%s409 + $0x20] sm:$0xff]
      %v467 = vld [vmem:[%s409 + $0x28] sm:$0xff]
      %v468 = vld [vmem:[%s409 + $0x30] sm:$0xff]
      %v469 = vld [vmem:[%s409 + $0x38] sm:$0xff]
      %v470 = vld [vmem:[%s409 + $0x40] sm:$0xff]
      %v471 = vld [vmem:[%s409 + $0x48] sm:$0xff]
      %v472 = vld [vmem:[%s409 + $0x50] sm:$0xff]
      %v473 = vld [vmem:[%s409 + $0x58] sm:$0xff]
      %v474 = vld [vmem:[%s409 + $0x60] sm:$0xff]
      %v475 = vld [vmem:[%s409 + $0x68] sm:$0xff]
      %v476 = vld [vmem:[%s409 + $0x70] sm:$0xff]
      %v477 = vld [vmem:[%s409 + $0x78] sm:$0xff]
      %v478 = vld [vmem:[%s409 + $0x80] sm:$0xff]
      %v479 = vld [vmem:[%s409 + $0x88] sm:$0xff]
      %v480 = vld [vmem:[%s409 + $0x90] sm:$0xff]
      %v481 = vld [vmem:[%s409 + $0x98] sm:$0xff]
      %v482 = vld [vmem:[%s409 + $0xa0] sm:$0xff]
      %v483 = vld [vmem:[%s409 + $0xa8] sm:$0xff]
      %v484 = vld [vmem:[%s409 + $0xb0] sm:$0xff]
      %v485 = vld [vmem:[%s409 + $0xb8] sm:$0xff]
      %v486 = vld [vmem:[%s409 + $0xc0] sm:$0xff]
      %v487 = vld [vmem:[%s409 + $0xc8] sm:$0xff]
      %v488 = vld [vmem:[%s409 + $0xd0] sm:$0xff]
      %v489 = vld [vmem:[%s409 + $0xd8] sm:$0xff]
      %v490 = vld [vmem:[%s409 + $0xe0] sm:$0xff]
      %v491 = vld [vmem:[%s409 + $0xe8] sm:$0xff]
      %v492 = vld [vmem:[%s409 + $0xf0] sm:$0xff]
      %v493 = vld [vmem:[%s409 + $0xf8] sm:$0xff]
      %v494 = vld [vmem:[%s4] sm:$0xff]
      %v495 = vld [vmem:[%s4 + $0x8] sm:$0xff]
      %v496 = vld [vmem:[%s4 + $0x10] sm:$0xff]
      %v497 = vld [vmem:[%s4 + $0x18] sm:$0xff]
      %v498 = vld [vmem:[%s4 + $0x20] sm:$0xff]
      %v499 = vld [vmem:[%s4 + $0x28] sm:$0xff]
      %v500 = vld [vmem:[%s4 + $0x30] sm:$0xff]
      %v501 = vld [vmem:[%s4 + $0x38] sm:$0xff]
      %v502 = vld [vmem:[%s4 + $0x40] sm:$0xff]
      %v503 = vperm.slane %v461, 0
      %vm504 = vcmask 588800
      %v506 = vsel %vm504, %v462, 0
      %v509 = vsel %vm504, %v463, 0
      %v512 = vsel %vm504, %v464, 0
      %v515 = vsel %vm504, %v465, 0
      %v518 = vsel %vm504, %v466, 0
      %v521 = vsel %vm504, %v467, 0
      %v524 = vsel %vm504, %v468, 0
      %v527 = vsel %vm504, %v469, 0
      %v530 = vsel %vm504, %v470, 0
      %v533 = vsel %vm504, %v471, 0
      %v536 = vsel %vm504, %v472, 0
      %v539 = vsel %vm504, %v473, 0
      %v542 = vsel %vm504, %v474, 0
      %v545 = vsel %vm504, %v475, 0
      %v548 = vsel %vm504, %v476, 0
      %v551 = vsel %vm504, %v477, 0
      %v554 = vsel %vm504, %v478, 0
      %v557 = vsel %vm504, %v479, 0
      %v560 = vsel %vm504, %v480, 0
      %v563 = vsel %vm504, %v481, 0
      %v566 = vsel %vm504, %v482, 0
      %v569 = vsel %vm504, %v483, 0
      %v572 = vsel %vm504, %v484, 0
      %v575 = vsel %vm504, %v485, 0
      %v578 = vsel %vm504, %v486, 0
      %v581 = vsel %vm504, %v487, 0
      %v584 = vsel %vm504, %v488, 0
      %v587 = vsel %vm504, %v489, 0
      %v590 = vsel %vm504, %v490, 0
      %v593 = vsel %vm504, %v491, 0
      %v596 = vsel %vm504, %v492, 0
      %v599 = vsel %vm504, %v493, 0
      %601 = vmatpush.msra.mxu0 0.0
      %602 = vmatpush.msra.mxu0 0.0
      %603 = vmatpush.msra.mxu0 0.0
      %604 = vmatpush.msra.mxu0 0.0
      %605 = vmatpush.msra.mxu0 0.0
      %606 = vmatpush.msra.mxu0 0.0
      %607 = vmatpush.msra.mxu0 0.0
      %608 = vmatpush.msra.mxu0 %v502
      %609 = vmatpush.msra.mxu0 %v501
      %610 = vmatpush.msra.mxu0 %v500
      %611 = vmatpush.msra.mxu0 %v499
      %612 = vmatpush.msra.mxu0 %v498
      %613 = vmatpush.msra.mxu0 %v497
      %614 = vmatpush.msra.mxu0 %v496
      %615 = vmatpush.msra.mxu0 %v495
      %616 = vmatpush.msra.mxu0 %v494
      %617 = vmatmul.f32.gmra.mxu0 %v506
      %v618 = vpop.f32.mrf.mxu0
      %v619 = vadd.f32 %v503, %v618
      %620 = vmatmul.f32.gmra.mxu0 %v509
      %v621 = vpop.f32.mrf.mxu0
      %v622 = vadd.f32 %v503, %v621
      %623 = vmatmul.f32.gmra.mxu0 %v512
      %v624 = vpop.f32.mrf.mxu0
      %v625 = vadd.f32 %v503, %v624
      %626 = vmatmul.f32.gmra.mxu0 %v515
      %v627 = vpop.f32.mrf.mxu0
      %v628 = vadd.f32 %v503, %v627
      %629 = vmatmul.f32.gmra.mxu0 %v518
      %v630 = vpop.f32.mrf.mxu0
      %v631 = vadd.f32 %v503, %v630
      %632 = vmatmul.f32.gmra.mxu0 %v521
      %v633 = vpop.f32.mrf.mxu0
      %v634 = vadd.f32 %v503, %v633
      %635 = vmatmul.f32.gmra.mxu0 %v524
      %v636 = vpop.f32.mrf.mxu0
      %v637 = vadd.f32 %v503, %v636
      %638 = vmatmul.f32.gmra.mxu0 %v527
      %v639 = vpop.f32.mrf.mxu0
      %v640 = vadd.f32 %v503, %v639
      %641 = vmatmul.f32.gmra.mxu0 %v530
      %v642 = vpop.f32.mrf.mxu0
      %v643 = vadd.f32 %v503, %v642
      %644 = vmatmul.f32.gmra.mxu0 %v533
      %v645 = vpop.f32.mrf.mxu0
      %v646 = vadd.f32 %v503, %v645
      %647 = vmatmul.f32.gmra.mxu0 %v536
      %v648 = vpop.f32.mrf.mxu0
      %v649 = vadd.f32 %v503, %v648
      %650 = vmatmul.f32.gmra.mxu0 %v539
      %v651 = vpop.f32.mrf.mxu0
      %v652 = vadd.f32 %v503, %v651
      %653 = vmatmul.f32.gmra.mxu0 %v542
      %v654 = vpop.f32.mrf.mxu0
      %v655 = vadd.f32 %v503, %v654
      %656 = vmatmul.f32.gmra.mxu0 %v545
      %v657 = vpop.f32.mrf.mxu0
      %v658 = vadd.f32 %v503, %v657
      %659 = vmatmul.f32.gmra.mxu0 %v548
      %v660 = vpop.f32.mrf.mxu0
      %v661 = vadd.f32 %v503, %v660
      %662 = vmatmul.f32.gmra.mxu0 %v551
      %v663 = vpop.f32.mrf.mxu0
      %v664 = vadd.f32 %v503, %v663
      %665 = vmatmul.f32.gmra.mxu0 %v554
      %v666 = vpop.f32.mrf.mxu0
      %v667 = vadd.f32 %v503, %v666
      %668 = vmatmul.f32.gmra.mxu0 %v557
      %v669 = vpop.f32.mrf.mxu0
      %v670 = vadd.f32 %v503, %v669
      %671 = vmatmul.f32.gmra.mxu0 %v560
      %v672 = vpop.f32.mrf.mxu0
      %v673 = vadd.f32 %v503, %v672
      %674 = vmatmul.f32.gmra.mxu0 %v563
      %v675 = vpop.f32.mrf.mxu0
      %v676 = vadd.f32 %v503, %v675
      %677 = vmatmul.f32.gmra.mxu0 %v566
      %v678 = vpop.f32.mrf.mxu0
      %v679 = vadd.f32 %v503, %v678
      %680 = vmatmul.f32.gmra.mxu0 %v569
      %v681 = vpop.f32.mrf.mxu0
      %v682 = vadd.f32 %v503, %v681
      %683 = vmatmul.f32.gmra.mxu0 %v572
      %v684 = vpop.f32.mrf.mxu0
      %v685 = vadd.f32 %v503, %v684
      %686 = vmatmul.f32.gmra.mxu0 %v575
      %v687 = vpop.f32.mrf.mxu0
      %v688 = vadd.f32 %v503, %v687
      %689 = vmatmul.f32.gmra.mxu0 %v578
      %v690 = vpop.f32.mrf.mxu0
      %v691 = vadd.f32 %v503, %v690
      %692 = vmatmul.f32.gmra.mxu0 %v581
      %v693 = vpop.f32.mrf.mxu0
      %v694 = vadd.f32 %v503, %v693
      %695 = vmatmul.f32.gmra.mxu0 %v584
      %v696 = vpop.f32.mrf.mxu0
      %v697 = vadd.f32 %v503, %v696
      %698 = vmatmul.f32.gmra.mxu0 %v587
      %v699 = vpop.f32.mrf.mxu0
      %v700 = vadd.f32 %v503, %v699
      %701 = vmatmul.f32.gmra.mxu0 %v590
      %v702 = vpop.f32.mrf.mxu0
      %v703 = vadd.f32 %v503, %v702
      %704 = vmatmul.f32.gmra.mxu0 %v593
      %v705 = vpop.f32.mrf.mxu0
      %v706 = vadd.f32 %v503, %v705
      %707 = vmatmul.f32.gmra.mxu0 %v596
      %v708 = vpop.f32.mrf.mxu0
      %v709 = vadd.f32 %v503, %v708
      %710 = vmatmul.f32.gmra.mxu0 %v599
      %v711 = vpop.f32.mrf.mxu0
      %v712 = vadd.f32 %v503, %v711
      %713 = vdwg.mxu0
      %v714 = vmax.f32 %v619, 0.0
      %v715 = vmax.f32 %v622, 0.0
      %v716 = vmax.f32 %v625, 0.0
      %v717 = vmax.f32 %v628, 0.0
      %v718 = vmax.f32 %v631, 0.0
      %v719 = vmax.f32 %v634, 0.0
      %v720 = vmax.f32 %v637, 0.0
      %v721 = vmax.f32 %v640, 0.0
      %v722 = vmax.f32 %v643, 0.0
      %v723 = vmax.f32 %v646, 0.0
      %v724 = vmax.f32 %v649, 0.0
      %v725 = vmax.f32 %v652, 0.0
      %v726 = vmax.f32 %v655, 0.0
      %v727 = vmax.f32 %v658, 0.0
      %v728 = vmax.f32 %v661, 0.0
      %v729 = vmax.f32 %v664, 0.0
      %v730 = vmax.f32 %v667, 0.0
      %v731 = vmax.f32 %v670, 0.0
      %v732 = vmax.f32 %v673, 0.0
      %v733 = vmax.f32 %v676, 0.0
      %v734 = vmax.f32 %v679, 0.0
      %v735 = vmax.f32 %v682, 0.0
      %v736 = vmax.f32 %v685, 0.0
      %v737 = vmax.f32 %v688, 0.0
      %v738 = vmax.f32 %v691, 0.0
      %v739 = vmax.f32 %v694, 0.0
      %v740 = vmax.f32 %v697, 0.0
      %v741 = vmax.f32 %v700, 0.0
      %v742 = vmax.f32 %v703, 0.0
      %v743 = vmax.f32 %v706, 0.0
      %v744 = vmax.f32 %v709, 0.0
      %v745 = vmax.f32 %v712, 0.0
      %v746 = vld [vmem:[%s7 + $0x1] sm:$0x1]
      %v747 = vld [vmem:[%s415] sm:$0xff]
      %v748 = vld [vmem:[%s415 + $0x8] sm:$0xff]
      %v749 = vld [vmem:[%s415 + $0x10] sm:$0xff]
      %v750 = vld [vmem:[%s415 + $0x18] sm:$0xff]
      %v751 = vld [vmem:[%s415 + $0x20] sm:$0xff]
      %v752 = vld [vmem:[%s415 + $0x28] sm:$0xff]
      %v753 = vld [vmem:[%s415 + $0x30] sm:$0xff]
      %v754 = vld [vmem:[%s415 + $0x38] sm:$0xff]
      %v755 = vld [vmem:[%s415 + $0x40] sm:$0xff]
      %v756 = vld [vmem:[%s415 + $0x48] sm:$0xff]
      %v757 = vld [vmem:[%s415 + $0x50] sm:$0xff]
      %v758 = vld [vmem:[%s415 + $0x58] sm:$0xff]
      %v759 = vld [vmem:[%s415 + $0x60] sm:$0xff]
      %v760 = vld [vmem:[%s415 + $0x68] sm:$0xff]
      %v761 = vld [vmem:[%s415 + $0x70] sm:$0xff]
      %v762 = vld [vmem:[%s415 + $0x78] sm:$0xff]
      %v763 = vld [vmem:[%s415 + $0x80] sm:$0xff]
      %v764 = vld [vmem:[%s415 + $0x88] sm:$0xff]
      %v765 = vld [vmem:[%s415 + $0x90] sm:$0xff]
      %v766 = vld [vmem:[%s415 + $0x98] sm:$0xff]
      %v767 = vld [vmem:[%s415 + $0xa0] sm:$0xff]
      %v768 = vld [vmem:[%s415 + $0xa8] sm:$0xff]
      %v769 = vld [vmem:[%s415 + $0xb0] sm:$0xff]
      %v770 = vld [vmem:[%s415 + $0xb8] sm:$0xff]
      %v771 = vld [vmem:[%s415 + $0xc0] sm:$0xff]
      %v772 = vld [vmem:[%s415 + $0xc8] sm:$0xff]
      %v773 = vld [vmem:[%s415 + $0xd0] sm:$0xff]
      %v774 = vld [vmem:[%s415 + $0xd8] sm:$0xff]
      %v775 = vld [vmem:[%s415 + $0xe0] sm:$0xff]
      %v776 = vld [vmem:[%s415 + $0xe8] sm:$0xff]
      %v777 = vld [vmem:[%s415 + $0xf0] sm:$0xff]
      %v778 = vld [vmem:[%s415 + $0xf8] sm:$0xff]
      %v779 = vld [vmem:[%s5] sm:$0xff]
      %v780 = vld [vmem:[%s5 + $0x8] sm:$0xff]
      %v781 = vld [vmem:[%s5 + $0x10] sm:$0xff]
      %v782 = vld [vmem:[%s5 + $0x18] sm:$0xff]
      %v783 = vld [vmem:[%s5 + $0x20] sm:$0xff]
      %v784 = vld [vmem:[%s5 + $0x28] sm:$0xff]
      %v785 = vld [vmem:[%s5 + $0x30] sm:$0xff]
      %v786 = vld [vmem:[%s5 + $0x38] sm:$0xff]
      %v787 = vld [vmem:[%s5 + $0x40] sm:$0xff]
      %v788 = vperm.slane %v746, 0
      %v790 = vsel %vm504, %v747, 0
      %v793 = vsel %vm504, %v748, 0
      %v796 = vsel %vm504, %v749, 0
      %v799 = vsel %vm504, %v750, 0
      %v802 = vsel %vm504, %v751, 0
      %v805 = vsel %vm504, %v752, 0
      %v808 = vsel %vm504, %v753, 0
      %v811 = vsel %vm504, %v754, 0
      %v814 = vsel %vm504, %v755, 0
      %v817 = vsel %vm504, %v756, 0
      %v820 = vsel %vm504, %v757, 0
      %v823 = vsel %vm504, %v758, 0
      %v826 = vsel %vm504, %v759, 0
      %v829 = vsel %vm504, %v760, 0
      %v832 = vsel %vm504, %v761, 0
      %v835 = vsel %vm504, %v762, 0
      %v838 = vsel %vm504, %v763, 0
      %v841 = vsel %vm504, %v764, 0
      %v844 = vsel %vm504, %v765, 0
      %v847 = vsel %vm504, %v766, 0
      %v850 = vsel %vm504, %v767, 0
      %v853 = vsel %vm504, %v768, 0
      %v856 = vsel %vm504, %v769, 0
      %v859 = vsel %vm504, %v770, 0
      %v862 = vsel %vm504, %v771, 0
      %v865 = vsel %vm504, %v772, 0
      %v868 = vsel %vm504, %v773, 0
      %v871 = vsel %vm504, %v774, 0
      %v874 = vsel %vm504, %v775, 0
      %v877 = vsel %vm504, %v776, 0
      %v880 = vsel %vm504, %v777, 0
      %v883 = vsel %vm504, %v778, 0
      %885 = vmatpush.msra.mxu0 0.0
      %886 = vmatpush.msra.mxu0 0.0
      %887 = vmatpush.msra.mxu0 0.0
      %888 = vmatpush.msra.mxu0 0.0
      %889 = vmatpush.msra.mxu0 0.0
      %890 = vmatpush.msra.mxu0 0.0
      %891 = vmatpush.msra.mxu0 0.0
      %892 = vmatpush.msra.mxu0 %v787
      %893 = vmatpush.msra.mxu0 %v786
      %894 = vmatpush.msra.mxu0 %v785
      %895 = vmatpush.msra.mxu0 %v784
      %896 = vmatpush.msra.mxu0 %v783
      %897 = vmatpush.msra.mxu0 %v782
      %898 = vmatpush.msra.mxu0 %v781
      %899 = vmatpush.msra.mxu0 %v780
      %900 = vmatpush.msra.mxu0 %v779
      %901 = vmatmul.f32.gmra.mxu0 %v790
      %v902 = vpop.f32.mrf.mxu0
      %v903 = vadd.f32 %v788, %v902
      %904 = vmatmul.f32.gmra.mxu0 %v793
      %v905 = vpop.f32.mrf.mxu0
      %v906 = vadd.f32 %v788, %v905
      %907 = vmatmul.f32.gmra.mxu0 %v796
      %v908 = vpop.f32.mrf.mxu0
      %v909 = vadd.f32 %v788, %v908
      %910 = vmatmul.f32.gmra.mxu0 %v799
      %v911 = vpop.f32.mrf.mxu0
      %v912 = vadd.f32 %v788, %v911
      %913 = vmatmul.f32.gmra.mxu0 %v802
      %v914 = vpop.f32.mrf.mxu0
      %v915 = vadd.f32 %v788, %v914
      %916 = vmatmul.f32.gmra.mxu0 %v805
      %v917 = vpop.f32.mrf.mxu0
      %v918 = vadd.f32 %v788, %v917
      %919 = vmatmul.f32.gmra.mxu0 %v808
      %v920 = vpop.f32.mrf.mxu0
      %v921 = vadd.f32 %v788, %v920
      %922 = vmatmul.f32.gmra.mxu0 %v811
      %v923 = vpop.f32.mrf.mxu0
      %v924 = vadd.f32 %v788, %v923
      %925 = vmatmul.f32.gmra.mxu0 %v814
      %v926 = vpop.f32.mrf.mxu0
      %v927 = vadd.f32 %v788, %v926
      %928 = vmatmul.f32.gmra.mxu0 %v817
      %v929 = vpop.f32.mrf.mxu0
      %v930 = vadd.f32 %v788, %v929
      %931 = vmatmul.f32.gmra.mxu0 %v820
      %v932 = vpop.f32.mrf.mxu0
      %v933 = vadd.f32 %v788, %v932
      %934 = vmatmul.f32.gmra.mxu0 %v823
      %v935 = vpop.f32.mrf.mxu0
      %v936 = vadd.f32 %v788, %v935
      %937 = vmatmul.f32.gmra.mxu0 %v826
      %v938 = vpop.f32.mrf.mxu0
      %v939 = vadd.f32 %v788, %v938
      %940 = vmatmul.f32.gmra.mxu0 %v829
      %v941 = vpop.f32.mrf.mxu0
      %v942 = vadd.f32 %v788, %v941
      %943 = vmatmul.f32.gmra.mxu0 %v832
      %v944 = vpop.f32.mrf.mxu0
      %v945 = vadd.f32 %v788, %v944
      %946 = vmatmul.f32.gmra.mxu0 %v835
      %v947 = vpop.f32.mrf.mxu0
      %v948 = vadd.f32 %v788, %v947
      %949 = vmatmul.f32.gmra.mxu0 %v838
      %v950 = vpop.f32.mrf.mxu0
      %v951 = vadd.f32 %v788, %v950
      %952 = vmatmul.f32.gmra.mxu0 %v841
      %v953 = vpop.f32.mrf.mxu0
      %v954 = vadd.f32 %v788, %v953
      %955 = vmatmul.f32.gmra.mxu0 %v844
      %v956 = vpop.f32.mrf.mxu0
      %v957 = vadd.f32 %v788, %v956
      %958 = vmatmul.f32.gmra.mxu0 %v847
      %v959 = vpop.f32.mrf.mxu0
      %v960 = vadd.f32 %v788, %v959
      %961 = vmatmul.f32.gmra.mxu0 %v850
      %v962 = vpop.f32.mrf.mxu0
      %v963 = vadd.f32 %v788, %v962
      %964 = vmatmul.f32.gmra.mxu0 %v853
      %v965 = vpop.f32.mrf.mxu0
      %v966 = vadd.f32 %v788, %v965
      %967 = vmatmul.f32.gmra.mxu0 %v856
      %v968 = vpop.f32.mrf.mxu0
      %v969 = vadd.f32 %v788, %v968
      %970 = vmatmul.f32.gmra.mxu0 %v859
      %v971 = vpop.f32.mrf.mxu0
      %v972 = vadd.f32 %v788, %v971
      %973 = vmatmul.f32.gmra.mxu0 %v862
      %v974 = vpop.f32.mrf.mxu0
      %v975 = vadd.f32 %v788, %v974
      %976 = vmatmul.f32.gmra.mxu0 %v865
      %v977 = vpop.f32.mrf.mxu0
      %v978 = vadd.f32 %v788, %v977
      %979 = vmatmul.f32.gmra.mxu0 %v868
      %v980 = vpop.f32.mrf.mxu0
      %v981 = vadd.f32 %v788, %v980
      %982 = vmatmul.f32.gmra.mxu0 %v871
      %v983 = vpop.f32.mrf.mxu0
      %v984 = vadd.f32 %v788, %v983
      %985 = vmatmul.f32.gmra.mxu0 %v874
      %v986 = vpop.f32.mrf.mxu0
      %v987 = vadd.f32 %v788, %v986
      %988 = vmatmul.f32.gmra.mxu0 %v877
      %v989 = vpop.f32.mrf.mxu0
      %v990 = vadd.f32 %v788, %v989
      %991 = vmatmul.f32.gmra.mxu0 %v880
      %v992 = vpop.f32.mrf.mxu0
      %v993 = vadd.f32 %v788, %v992
      %994 = vmatmul.f32.gmra.mxu0 %v883
      %v995 = vpop.f32.mrf.mxu0
      %v996 = vadd.f32 %v788, %v995
      %997 = vdwg.mxu0
      %v998 = vmax.f32 %v903, 0.0
      %v999 = vmax.f32 %v906, 0.0
      %v1000 = vmax.f32 %v909, 0.0
      %v1001 = vmax.f32 %v912, 0.0
      %v1002 = vmax.f32 %v915, 0.0
      %v1003 = vmax.f32 %v918, 0.0
      %v1004 = vmax.f32 %v921, 0.0
      %v1005 = vmax.f32 %v924, 0.0
      %v1006 = vmax.f32 %v927, 0.0
      %v1007 = vmax.f32 %v930, 0.0
      %v1008 = vmax.f32 %v933, 0.0
      %v1009 = vmax.f32 %v936, 0.0
      %v1010 = vmax.f32 %v939, 0.0
      %v1011 = vmax.f32 %v942, 0.0
      %v1012 = vmax.f32 %v945, 0.0
      %v1013 = vmax.f32 %v948, 0.0
      %v1014 = vmax.f32 %v951, 0.0
      %v1015 = vmax.f32 %v954, 0.0
      %v1016 = vmax.f32 %v957, 0.0
      %v1017 = vmax.f32 %v960, 0.0
      %v1018 = vmax.f32 %v963, 0.0
      %v1019 = vmax.f32 %v966, 0.0
      %v1020 = vmax.f32 %v969, 0.0
      %v1021 = vmax.f32 %v972, 0.0
      %v1022 = vmax.f32 %v975, 0.0
      %v1023 = vmax.f32 %v978, 0.0
      %v1024 = vmax.f32 %v981, 0.0
      %v1025 = vmax.f32 %v984, 0.0
      %v1026 = vmax.f32 %v987, 0.0
      %v1027 = vmax.f32 %v990, 0.0
      %v1028 = vmax.f32 %v993, 0.0
      %v1029 = vmax.f32 %v996, 0.0
      %v1030 = vld [vmem:[%s7 + $0x2] sm:$0x1]
      %v1031 = vld [vmem:[%s421] sm:$0xff]
      %v1032 = vld [vmem:[%s421 + $0x8] sm:$0xff]
      %v1033 = vld [vmem:[%s421 + $0x10] sm:$0xff]
      %v1034 = vld [vmem:[%s421 + $0x18] sm:$0xff]
      %v1035 = vld [vmem:[%s421 + $0x20] sm:$0xff]
      %v1036 = vld [vmem:[%s421 + $0x28] sm:$0xff]
      %v1037 = vld [vmem:[%s421 + $0x30] sm:$0xff]
      %v1038 = vld [vmem:[%s421 + $0x38] sm:$0xff]
      %v1039 = vld [vmem:[%s421 + $0x40] sm:$0xff]
      %v1040 = vld [vmem:[%s421 + $0x48] sm:$0xff]
      %v1041 = vld [vmem:[%s421 + $0x50] sm:$0xff]
      %v1042 = vld [vmem:[%s421 + $0x58] sm:$0xff]
      %v1043 = vld [vmem:[%s421 + $0x60] sm:$0xff]
      %v1044 = vld [vmem:[%s421 + $0x68] sm:$0xff]
      %v1045 = vld [vmem:[%s421 + $0x70] sm:$0xff]
      %v1046 = vld [vmem:[%s421 + $0x78] sm:$0xff]
      %v1047 = vld [vmem:[%s421 + $0x80] sm:$0xff]
      %v1048 = vld [vmem:[%s421 + $0x88] sm:$0xff]
      %v1049 = vld [vmem:[%s421 + $0x90] sm:$0xff]
      %v1050 = vld [vmem:[%s421 + $0x98] sm:$0xff]
      %v1051 = vld [vmem:[%s421 + $0xa0] sm:$0xff]
      %v1052 = vld [vmem:[%s421 + $0xa8] sm:$0xff]
      %v1053 = vld [vmem:[%s421 + $0xb0] sm:$0xff]
      %v1054 = vld [vmem:[%s421 + $0xb8] sm:$0xff]
      %v1055 = vld [vmem:[%s421 + $0xc0] sm:$0xff]
      %v1056 = vld [vmem:[%s421 + $0xc8] sm:$0xff]
      %v1057 = vld [vmem:[%s421 + $0xd0] sm:$0xff]
      %v1058 = vld [vmem:[%s421 + $0xd8] sm:$0xff]
      %v1059 = vld [vmem:[%s421 + $0xe0] sm:$0xff]
      %v1060 = vld [vmem:[%s421 + $0xe8] sm:$0xff]
      %v1061 = vld [vmem:[%s421 + $0xf0] sm:$0xff]
      %v1062 = vld [vmem:[%s421 + $0xf8] sm:$0xff]
      %v1063 = vld [vmem:[%s6] sm:$0xff]
      %v1064 = vld [vmem:[%s6 + $0x8] sm:$0xff]
      %v1065 = vld [vmem:[%s6 + $0x10] sm:$0xff]
      %v1066 = vld [vmem:[%s6 + $0x18] sm:$0xff]
      %v1067 = vld [vmem:[%s6 + $0x20] sm:$0xff]
      %v1068 = vld [vmem:[%s6 + $0x28] sm:$0xff]
      %v1069 = vld [vmem:[%s6 + $0x30] sm:$0xff]
      %v1070 = vld [vmem:[%s6 + $0x38] sm:$0xff]
      %v1071 = vld [vmem:[%s6 + $0x40] sm:$0xff]
      %v1072 = vperm.slane %v1030, 0
      %v1074 = vsel %vm504, %v1031, 0
      %v1077 = vsel %vm504, %v1032, 0
      %v1080 = vsel %vm504, %v1033, 0
      %v1083 = vsel %vm504, %v1034, 0
      %v1086 = vsel %vm504, %v1035, 0
      %v1089 = vsel %vm504, %v1036, 0
      %v1092 = vsel %vm504, %v1037, 0
      %v1095 = vsel %vm504, %v1038, 0
      %v1098 = vsel %vm504, %v1039, 0
      %v1101 = vsel %vm504, %v1040, 0
      %v1104 = vsel %vm504, %v1041, 0
      %v1107 = vsel %vm504, %v1042, 0
      %v1110 = vsel %vm504, %v1043, 0
      %v1113 = vsel %vm504, %v1044, 0
      %v1116 = vsel %vm504, %v1045, 0
      %v1119 = vsel %vm504, %v1046, 0
      %v1122 = vsel %vm504, %v1047, 0
      %v1125 = vsel %vm504, %v1048, 0
      %v1128 = vsel %vm504, %v1049, 0
      %v1131 = vsel %vm504, %v1050, 0
      %v1134 = vsel %vm504, %v1051, 0
      %v1137 = vsel %vm504, %v1052, 0
      %v1140 = vsel %vm504, %v1053, 0
      %v1143 = vsel %vm504, %v1054, 0
      %v1146 = vsel %vm504, %v1055, 0
      %v1149 = vsel %vm504, %v1056, 0
      %v1152 = vsel %vm504, %v1057, 0
      %v1155 = vsel %vm504, %v1058, 0
      %v1158 = vsel %vm504, %v1059, 0
      %v1161 = vsel %vm504, %v1060, 0
      %v1164 = vsel %vm504, %v1061, 0
      %v1167 = vsel %vm504, %v1062, 0
      %1169 = vmatpush.msra.mxu0 0.0
      %1170 = vmatpush.msra.mxu0 0.0
      %1171 = vmatpush.msra.mxu0 0.0
      %1172 = vmatpush.msra.mxu0 0.0
      %1173 = vmatpush.msra.mxu0 0.0
      %1174 = vmatpush.msra.mxu0 0.0
      %1175 = vmatpush.msra.mxu0 0.0
      %1176 = vmatpush.msra.mxu0 %v1071
      %1177 = vmatpush.msra.mxu0 %v1070
      %1178 = vmatpush.msra.mxu0 %v1069
      %1179 = vmatpush.msra.mxu0 %v1068
      %1180 = vmatpush.msra.mxu0 %v1067
      %1181 = vmatpush.msra.mxu0 %v1066
      %1182 = vmatpush.msra.mxu0 %v1065
      %1183 = vmatpush.msra.mxu0 %v1064
      %1184 = vmatpush.msra.mxu0 %v1063
      %1185 = vmatmul.f32.gmra.mxu0 %v1074
      %v1186 = vpop.f32.mrf.mxu0
      %v1187 = vadd.f32 %v1072, %v1186
      %1188 = vmatmul.f32.gmra.mxu0 %v1077
      %v1189 = vpop.f32.mrf.mxu0
      %v1190 = vadd.f32 %v1072, %v1189
      %1191 = vmatmul.f32.gmra.mxu0 %v1080
      %v1192 = vpop.f32.mrf.mxu0
      %v1193 = vadd.f32 %v1072, %v1192
      %1194 = vmatmul.f32.gmra.mxu0 %v1083
      %v1195 = vpop.f32.mrf.mxu0
      %v1196 = vadd.f32 %v1072, %v1195
      %1197 = vmatmul.f32.gmra.mxu0 %v1086
      %v1198 = vpop.f32.mrf.mxu0
      %v1199 = vadd.f32 %v1072, %v1198
      %1200 = vmatmul.f32.gmra.mxu0 %v1089
      %v1201 = vpop.f32.mrf.mxu0
      %v1202 = vadd.f32 %v1072, %v1201
      %1203 = vmatmul.f32.gmra.mxu0 %v1092
      %v1204 = vpop.f32.mrf.mxu0
      %v1205 = vadd.f32 %v1072, %v1204
      %1206 = vmatmul.f32.gmra.mxu0 %v1095
      %v1207 = vpop.f32.mrf.mxu0
      %v1208 = vadd.f32 %v1072, %v1207
      %1209 = vmatmul.f32.gmra.mxu0 %v1098
      %v1210 = vpop.f32.mrf.mxu0
      %v1211 = vadd.f32 %v1072, %v1210
      %1212 = vmatmul.f32.gmra.mxu0 %v1101
      %v1213 = vpop.f32.mrf.mxu0
      %v1214 = vadd.f32 %v1072, %v1213
      %1215 = vmatmul.f32.gmra.mxu0 %v1104
      %v1216 = vpop.f32.mrf.mxu0
      %v1217 = vadd.f32 %v1072, %v1216
      %1218 = vmatmul.f32.gmra.mxu0 %v1107
      %v1219 = vpop.f32.mrf.mxu0
      %v1220 = vadd.f32 %v1072, %v1219
      %1221 = vmatmul.f32.gmra.mxu0 %v1110
      %v1222 = vpop.f32.mrf.mxu0
      %v1223 = vadd.f32 %v1072, %v1222
      %1224 = vmatmul.f32.gmra.mxu0 %v1113
      %v1225 = vpop.f32.mrf.mxu0
      %v1226 = vadd.f32 %v1072, %v1225
      %1227 = vmatmul.f32.gmra.mxu0 %v1116
      %v1228 = vpop.f32.mrf.mxu0
      %v1229 = vadd.f32 %v1072, %v1228
      %1230 = vmatmul.f32.gmra.mxu0 %v1119
      %v1231 = vpop.f32.mrf.mxu0
      %v1232 = vadd.f32 %v1072, %v1231
      %1233 = vmatmul.f32.gmra.mxu0 %v1122
      %v1234 = vpop.f32.mrf.mxu0
      %v1235 = vadd.f32 %v1072, %v1234
      %1236 = vmatmul.f32.gmra.mxu0 %v1125
      %v1237 = vpop.f32.mrf.mxu0
      %v1238 = vadd.f32 %v1072, %v1237
      %1239 = vmatmul.f32.gmra.mxu0 %v1128
      %v1240 = vpop.f32.mrf.mxu0
      %v1241 = vadd.f32 %v1072, %v1240
      %1242 = vmatmul.f32.gmra.mxu0 %v1131
      %v1243 = vpop.f32.mrf.mxu0
      %v1244 = vadd.f32 %v1072, %v1243
      %1245 = vmatmul.f32.gmra.mxu0 %v1134
      %v1246 = vpop.f32.mrf.mxu0
      %v1247 = vadd.f32 %v1072, %v1246
      %1248 = vmatmul.f32.gmra.mxu0 %v1137
      %v1249 = vpop.f32.mrf.mxu0
      %v1250 = vadd.f32 %v1072, %v1249
      %1251 = vmatmul.f32.gmra.mxu0 %v1140
      %v1252 = vpop.f32.mrf.mxu0
      %v1253 = vadd.f32 %v1072, %v1252
      %1254 = vmatmul.f32.gmra.mxu0 %v1143
      %v1255 = vpop.f32.mrf.mxu0
      %v1256 = vadd.f32 %v1072, %v1255
      %1257 = vmatmul.f32.gmra.mxu0 %v1146
      %v1258 = vpop.f32.mrf.mxu0
      %v1259 = vadd.f32 %v1072, %v1258
      %1260 = vmatmul.f32.gmra.mxu0 %v1149
      %v1261 = vpop.f32.mrf.mxu0
      %v1262 = vadd.f32 %v1072, %v1261
      %1263 = vmatmul.f32.gmra.mxu0 %v1152
      %v1264 = vpop.f32.mrf.mxu0
      %v1265 = vadd.f32 %v1072, %v1264
      %1266 = vmatmul.f32.gmra.mxu0 %v1155
      %v1267 = vpop.f32.mrf.mxu0
      %v1268 = vadd.f32 %v1072, %v1267
      %1269 = vmatmul.f32.gmra.mxu0 %v1158
      %v1270 = vpop.f32.mrf.mxu0
      %v1271 = vadd.f32 %v1072, %v1270
      %1272 = vmatmul.f32.gmra.mxu0 %v1161
      %v1273 = vpop.f32.mrf.mxu0
      %v1274 = vadd.f32 %v1072, %v1273
      %1275 = vmatmul.f32.gmra.mxu0 %v1164
      %v1276 = vpop.f32.mrf.mxu0
      %v1277 = vadd.f32 %v1072, %v1276
      %1278 = vmatmul.f32.gmra.mxu0 %v1167
      %v1279 = vpop.f32.mrf.mxu0
      %v1280 = vadd.f32 %v1072, %v1279
      %1281 = vdwg.mxu0
      %v1282 = vmax.f32 %v1187, 0.0
      %v1283 = vmax.f32 %v1190, 0.0
      %v1284 = vmax.f32 %v1193, 0.0
      %v1285 = vmax.f32 %v1196, 0.0
      %v1286 = vmax.f32 %v1199, 0.0
      %v1287 = vmax.f32 %v1202, 0.0
      %v1288 = vmax.f32 %v1205, 0.0
      %v1289 = vmax.f32 %v1208, 0.0
      %v1290 = vmax.f32 %v1211, 0.0
      %v1291 = vmax.f32 %v1214, 0.0
      %v1292 = vmax.f32 %v1217, 0.0
      %v1293 = vmax.f32 %v1220, 0.0
      %v1294 = vmax.f32 %v1223, 0.0
      %v1295 = vmax.f32 %v1226, 0.0
      %v1296 = vmax.f32 %v1229, 0.0
      %v1297 = vmax.f32 %v1232, 0.0
      %v1298 = vmax.f32 %v1235, 0.0
      %v1299 = vmax.f32 %v1238, 0.0
      %v1300 = vmax.f32 %v1241, 0.0
      %v1301 = vmax.f32 %v1244, 0.0
      %v1302 = vmax.f32 %v1247, 0.0
      %v1303 = vmax.f32 %v1250, 0.0
      %v1304 = vmax.f32 %v1253, 0.0
      %v1305 = vmax.f32 %v1256, 0.0
      %v1306 = vmax.f32 %v1259, 0.0
      %v1307 = vmax.f32 %v1262, 0.0
      %v1308 = vmax.f32 %v1265, 0.0
      %v1309 = vmax.f32 %v1268, 0.0
      %v1310 = vmax.f32 %v1271, 0.0
      %v1311 = vmax.f32 %v1274, 0.0
      %v1312 = vmax.f32 %v1277, 0.0
      %v1313 = vmax.f32 %v1280, 0.0
      %v1314 = vld [vmem:[%s8] sm:$0xff]
      %v1315 = vld [vmem:[%s8 + $0x8] sm:$0xff]
      %vm1316 = vcmask 64512
      %v1318 = vsel %vm1316, %v714, 0
      %v1321 = vsel %vm1316, %v715, 0
      %v1324 = vsel %vm1316, %v716, 0
      %v1327 = vsel %vm1316, %v717, 0
      %v1330 = vsel %vm1316, %v718, 0
      %v1333 = vsel %vm1316, %v719, 0
      %v1336 = vsel %vm1316, %v720, 0
      %v1339 = vsel %vm1316, %v721, 0
      %v1342 = vsel %vm1316, %v722, 0
      %v1345 = vsel %vm1316, %v723, 0
      %v1348 = vsel %vm1316, %v724, 0
      %v1351 = vsel %vm1316, %v725, 0
      %v1354 = vsel %vm1316, %v726, 0
      %v1357 = vsel %vm1316, %v727, 0
      %v1360 = vsel %vm1316, %v728, 0
      %v1363 = vsel %vm1316, %v729, 0
      %v1366 = vsel %vm1316, %v730, 0
      %v1369 = vsel %vm1316, %v731, 0
      %v1372 = vsel %vm1316, %v732, 0
      %v1375 = vsel %vm1316, %v733, 0
      %v1378 = vsel %vm1316, %v734, 0
      %v1381 = vsel %vm1316, %v735, 0
      %v1384 = vsel %vm1316, %v736, 0
      %v1387 = vsel %vm1316, %v737, 0
      %v1390 = vsel %vm1316, %v738, 0
      %v1393 = vsel %vm1316, %v739, 0
      %v1396 = vsel %vm1316, %v740, 0
      %v1399 = vsel %vm1316, %v741, 0
      %v1402 = vsel %vm1316, %v742, 0
      %v1405 = vsel %vm1316, %v743, 0
      %v1408 = vsel %vm1316, %v744, 0
      %v1411 = vsel %vm1316, %v745, 0
      %1413 = vmatpush.msra.mxu0 0.0
      %1414 = vmatpush.msra.mxu0 0.0
      %1415 = vmatpush.msra.mxu0 0.0
      %1416 = vmatpush.msra.mxu0 0.0
      %1417 = vmatpush.msra.mxu0 0.0
      %1418 = vmatpush.msra.mxu0 0.0
      %1419 = vmatpush.msra.mxu0 0.0
      %1420 = vmatpush.msra.mxu0 0.0
      %1421 = vmatpush.msra.mxu0 0.0
      %1422 = vmatpush.msra.mxu0 0.0
      %1423 = vmatpush.msra.mxu0 0.0
      %1424 = vmatpush.msra.mxu0 0.0
      %1425 = vmatpush.msra.mxu0 0.0
      %1426 = vmatpush.msra.mxu0 0.0
      %1427 = vmatpush.msra.mxu0 0.0
      %1428 = vmatpush.msra.mxu0 %v1315
      %1429 = vmatmul.f32.gmra.mxu0 %v1318
      %v1430 = vpop.f32.mrf.mxu0
      %v1431 = vadd.f32 0.0, %v1430
      %1432 = vmatmul.f32.gmra.mxu0 %v1321
      %v1433 = vpop.f32.mrf.mxu0
      %v1434 = vadd.f32 0.0, %v1433
      %1435 = vmatmul.f32.gmra.mxu0 %v1324
      %v1436 = vpop.f32.mrf.mxu0
      %v1437 = vadd.f32 0.0, %v1436
      %1438 = vmatmul.f32.gmra.mxu0 %v1327
      %v1439 = vpop.f32.mrf.mxu0
      %v1440 = vadd.f32 0.0, %v1439
      %1441 = vmatmul.f32.gmra.mxu0 %v1330
      %v1442 = vpop.f32.mrf.mxu0
      %v1443 = vadd.f32 0.0, %v1442
      %1444 = vmatmul.f32.gmra.mxu0 %v1333
      %v1445 = vpop.f32.mrf.mxu0
      %v1446 = vadd.f32 0.0, %v1445
      %1447 = vmatmul.f32.gmra.mxu0 %v1336
      %v1448 = vpop.f32.mrf.mxu0
      %v1449 = vadd.f32 0.0, %v1448
      %1450 = vmatmul.f32.gmra.mxu0 %v1339
      %v1451 = vpop.f32.mrf.mxu0
      %v1452 = vadd.f32 0.0, %v1451
      %1453 = vmatmul.f32.gmra.mxu0 %v1342
      %v1454 = vpop.f32.mrf.mxu0
      %v1455 = vadd.f32 0.0, %v1454
      %1456 = vmatmul.f32.gmra.mxu0 %v1345
      %v1457 = vpop.f32.mrf.mxu0
      %v1458 = vadd.f32 0.0, %v1457
      %1459 = vmatmul.f32.gmra.mxu0 %v1348
      %v1460 = vpop.f32.mrf.mxu0
      %v1461 = vadd.f32 0.0, %v1460
      %1462 = vmatmul.f32.gmra.mxu0 %v1351
      %v1463 = vpop.f32.mrf.mxu0
      %v1464 = vadd.f32 0.0, %v1463
      %1465 = vmatmul.f32.gmra.mxu0 %v1354
      %v1466 = vpop.f32.mrf.mxu0
      %v1467 = vadd.f32 0.0, %v1466
      %1468 = vmatmul.f32.gmra.mxu0 %v1357
      %v1469 = vpop.f32.mrf.mxu0
      %v1470 = vadd.f32 0.0, %v1469
      %1471 = vmatmul.f32.gmra.mxu0 %v1360
      %v1472 = vpop.f32.mrf.mxu0
      %v1473 = vadd.f32 0.0, %v1472
      %1474 = vmatmul.f32.gmra.mxu0 %v1363
      %v1475 = vpop.f32.mrf.mxu0
      %v1476 = vadd.f32 0.0, %v1475
      %1477 = vmatmul.f32.gmra.mxu0 %v1366
      %v1478 = vpop.f32.mrf.mxu0
      %v1479 = vadd.f32 0.0, %v1478
      %1480 = vmatmul.f32.gmra.mxu0 %v1369
      %v1481 = vpop.f32.mrf.mxu0
      %v1482 = vadd.f32 0.0, %v1481
      %1483 = vmatmul.f32.gmra.mxu0 %v1372
      %v1484 = vpop.f32.mrf.mxu0
      %v1485 = vadd.f32 0.0, %v1484
      %1486 = vmatmul.f32.gmra.mxu0 %v1375
      %v1487 = vpop.f32.mrf.mxu0
      %v1488 = vadd.f32 0.0, %v1487
      %1489 = vmatmul.f32.gmra.mxu0 %v1378
      %v1490 = vpop.f32.mrf.mxu0
      %v1491 = vadd.f32 0.0, %v1490
      %1492 = vmatmul.f32.gmra.mxu0 %v1381
      %v1493 = vpop.f32.mrf.mxu0
      %v1494 = vadd.f32 0.0, %v1493
      %1495 = vmatmul.f32.gmra.mxu0 %v1384
      %v1496 = vpop.f32.mrf.mxu0
      %v1497 = vadd.f32 0.0, %v1496
      %1498 = vmatmul.f32.gmra.mxu0 %v1387
      %v1499 = vpop.f32.mrf.mxu0
      %v1500 = vadd.f32 0.0, %v1499
      %1501 = vmatmul.f32.gmra.mxu0 %v1390
      %v1502 = vpop.f32.mrf.mxu0
      %v1503 = vadd.f32 0.0, %v1502
      %1504 = vmatmul.f32.gmra.mxu0 %v1393
      %v1505 = vpop.f32.mrf.mxu0
      %v1506 = vadd.f32 0.0, %v1505
      %1507 = vmatmul.f32.gmra.mxu0 %v1396
      %v1508 = vpop.f32.mrf.mxu0
      %v1509 = vadd.f32 0.0, %v1508
      %1510 = vmatmul.f32.gmra.mxu0 %v1399
      %v1511 = vpop.f32.mrf.mxu0
      %v1512 = vadd.f32 0.0, %v1511
      %1513 = vmatmul.f32.gmra.mxu0 %v1402
      %v1514 = vpop.f32.mrf.mxu0
      %v1515 = vadd.f32 0.0, %v1514
      %1516 = vmatmul.f32.gmra.mxu0 %v1405
      %v1517 = vpop.f32.mrf.mxu0
      %v1518 = vadd.f32 0.0, %v1517
      %1519 = vmatmul.f32.gmra.mxu0 %v1408
      %v1520 = vpop.f32.mrf.mxu0
      %v1521 = vadd.f32 0.0, %v1520
      %1522 = vmatmul.f32.gmra.mxu0 %v1411
      %v1523 = vpop.f32.mrf.mxu0
      %v1524 = vadd.f32 0.0, %v1523
      %1525 = vdwg.mxu0
      %v1527 = vsel %vm1316, %v429, 0
      %v1530 = vsel %vm1316, %v430, 0
      %v1533 = vsel %vm1316, %v431, 0
      %v1536 = vsel %vm1316, %v432, 0
      %v1539 = vsel %vm1316, %v433, 0
      %v1542 = vsel %vm1316, %v434, 0
      %v1545 = vsel %vm1316, %v435, 0
      %v1548 = vsel %vm1316, %v436, 0
      %v1551 = vsel %vm1316, %v437, 0
      %v1554 = vsel %vm1316, %v438, 0
      %v1557 = vsel %vm1316, %v439, 0
      %v1560 = vsel %vm1316, %v440, 0
      %v1563 = vsel %vm1316, %v441, 0
      %v1566 = vsel %vm1316, %v442, 0
      %v1569 = vsel %vm1316, %v443, 0
      %v1572 = vsel %vm1316, %v444, 0
      %v1575 = vsel %vm1316, %v445, 0
      %v1578 = vsel %vm1316, %v446, 0
      %v1581 = vsel %vm1316, %v447, 0
      %v1584 = vsel %vm1316, %v448, 0
      %v1587 = vsel %vm1316, %v449, 0
      %v1590 = vsel %vm1316, %v450, 0
      %v1593 = vsel %vm1316, %v451, 0
      %v1596 = vsel %vm1316, %v452, 0
      %v1599 = vsel %vm1316, %v453, 0
      %v1602 = vsel %vm1316, %v454, 0
      %v1605 = vsel %vm1316, %v455, 0
      %v1608 = vsel %vm1316, %v456, 0
      %v1611 = vsel %vm1316, %v457, 0
      %v1614 = vsel %vm1316, %v458, 0
      %v1617 = vsel %vm1316, %v459, 0
      %v1620 = vsel %vm1316, %v460, 0
      %1622 = vmatpush.msra.mxu0 0.0
      %1623 = vmatpush.msra.mxu0 0.0
      %1624 = vmatpush.msra.mxu0 0.0
      %1625 = vmatpush.msra.mxu0 0.0
      %1626 = vmatpush.msra.mxu0 0.0
      %1627 = vmatpush.msra.mxu0 0.0
      %1628 = vmatpush.msra.mxu0 0.0
      %1629 = vmatpush.msra.mxu0 0.0
      %1630 = vmatpush.msra.mxu0 0.0
      %1631 = vmatpush.msra.mxu0 0.0
      %1632 = vmatpush.msra.mxu0 0.0
      %1633 = vmatpush.msra.mxu0 0.0
      %1634 = vmatpush.msra.mxu0 0.0
      %1635 = vmatpush.msra.mxu0 0.0
      %1636 = vmatpush.msra.mxu0 0.0
      %1637 = vmatpush.msra.mxu0 %v1314
      %1638 = vmatmul.f32.gmra.mxu0 %v1527
      %v1639 = vpop.f32.mrf.mxu0
      %v1640 = vadd.f32 %v1431, %v1639
      %1641 = vmatmul.f32.gmra.mxu0 %v1530
      %v1642 = vpop.f32.mrf.mxu0
      %v1643 = vadd.f32 %v1434, %v1642
      %1644 = vmatmul.f32.gmra.mxu0 %v1533
      %v1645 = vpop.f32.mrf.mxu0
      %v1646 = vadd.f32 %v1437, %v1645
      %1647 = vmatmul.f32.gmra.mxu0 %v1536
      %v1648 = vpop.f32.mrf.mxu0
      %v1649 = vadd.f32 %v1440, %v1648
      %1650 = vmatmul.f32.gmra.mxu0 %v1539
      %v1651 = vpop.f32.mrf.mxu0
      %v1652 = vadd.f32 %v1443, %v1651
      %1653 = vmatmul.f32.gmra.mxu0 %v1542
      %v1654 = vpop.f32.mrf.mxu0
      %v1655 = vadd.f32 %v1446, %v1654
      %1656 = vmatmul.f32.gmra.mxu0 %v1545
      %v1657 = vpop.f32.mrf.mxu0
      %v1658 = vadd.f32 %v1449, %v1657
      %1659 = vmatmul.f32.gmra.mxu0 %v1548
      %v1660 = vpop.f32.mrf.mxu0
      %v1661 = vadd.f32 %v1452, %v1660
      %1662 = vmatmul.f32.gmra.mxu0 %v1551
      %v1663 = vpop.f32.mrf.mxu0
      %v1664 = vadd.f32 %v1455, %v1663
      %1665 = vmatmul.f32.gmra.mxu0 %v1554
      %v1666 = vpop.f32.mrf.mxu0
      %v1667 = vadd.f32 %v1458, %v1666
      %1668 = vmatmul.f32.gmra.mxu0 %v1557
      %v1669 = vpop.f32.mrf.mxu0
      %v1670 = vadd.f32 %v1461, %v1669
      %1671 = vmatmul.f32.gmra.mxu0 %v1560
      %v1672 = vpop.f32.mrf.mxu0
      %v1673 = vadd.f32 %v1464, %v1672
      %1674 = vmatmul.f32.gmra.mxu0 %v1563
      %v1675 = vpop.f32.mrf.mxu0
      %v1676 = vadd.f32 %v1467, %v1675
      %1677 = vmatmul.f32.gmra.mxu0 %v1566
      %v1678 = vpop.f32.mrf.mxu0
      %v1679 = vadd.f32 %v1470, %v1678
      %1680 = vmatmul.f32.gmra.mxu0 %v1569
      %v1681 = vpop.f32.mrf.mxu0
      %v1682 = vadd.f32 %v1473, %v1681
      %1683 = vmatmul.f32.gmra.mxu0 %v1572
      %v1684 = vpop.f32.mrf.mxu0
      %v1685 = vadd.f32 %v1476, %v1684
      %1686 = vmatmul.f32.gmra.mxu0 %v1575
      %v1687 = vpop.f32.mrf.mxu0
      %v1688 = vadd.f32 %v1479, %v1687
      %1689 = vmatmul.f32.gmra.mxu0 %v1578
      %v1690 = vpop.f32.mrf.mxu0
      %v1691 = vadd.f32 %v1482, %v1690
      %1692 = vmatmul.f32.gmra.mxu0 %v1581
      %v1693 = vpop.f32.mrf.mxu0
      %v1694 = vadd.f32 %v1485, %v1693
      %1695 = vmatmul.f32.gmra.mxu0 %v1584
      %v1696 = vpop.f32.mrf.mxu0
      %v1697 = vadd.f32 %v1488, %v1696
      %1698 = vmatmul.f32.gmra.mxu0 %v1587
      %v1699 = vpop.f32.mrf.mxu0
      %v1700 = vadd.f32 %v1491, %v1699
      %1701 = vmatmul.f32.gmra.mxu0 %v1590
      %v1702 = vpop.f32.mrf.mxu0
      %v1703 = vadd.f32 %v1494, %v1702
      %1704 = vmatmul.f32.gmra.mxu0 %v1593
      %v1705 = vpop.f32.mrf.mxu0
      %v1706 = vadd.f32 %v1497, %v1705
      %1707 = vmatmul.f32.gmra.mxu0 %v1596
      %v1708 = vpop.f32.mrf.mxu0
      %v1709 = vadd.f32 %v1500, %v1708
      %1710 = vmatmul.f32.gmra.mxu0 %v1599
      %v1711 = vpop.f32.mrf.mxu0
      %v1712 = vadd.f32 %v1503, %v1711
      %1713 = vmatmul.f32.gmra.mxu0 %v1602
      %v1714 = vpop.f32.mrf.mxu0
      %v1715 = vadd.f32 %v1506, %v1714
      %1716 = vmatmul.f32.gmra.mxu0 %v1605
      %v1717 = vpop.f32.mrf.mxu0
      %v1718 = vadd.f32 %v1509, %v1717
      %1719 = vmatmul.f32.gmra.mxu0 %v1608
      %v1720 = vpop.f32.mrf.mxu0
      %v1721 = vadd.f32 %v1512, %v1720
      %1722 = vmatmul.f32.gmra.mxu0 %v1611
      %v1723 = vpop.f32.mrf.mxu0
      %v1724 = vadd.f32 %v1515, %v1723
      %1725 = vmatmul.f32.gmra.mxu0 %v1614
      %v1726 = vpop.f32.mrf.mxu0
      %v1727 = vadd.f32 %v1518, %v1726
      %1728 = vmatmul.f32.gmra.mxu0 %v1617
      %v1729 = vpop.f32.mrf.mxu0
      %v1730 = vadd.f32 %v1521, %v1729
      %1731 = vmatmul.f32.gmra.mxu0 %v1620
      %v1732 = vpop.f32.mrf.mxu0
      %v1733 = vadd.f32 %v1524, %v1732
      %1734 = vdwg.mxu0
      %v1735 = vld [vmem:[%s8 + $0x10] sm:$0xff]
      %v1737 = vsel %vm1316, %v998, 0
      %v1740 = vsel %vm1316, %v999, 0
      %v1743 = vsel %vm1316, %v1000, 0
      %v1746 = vsel %vm1316, %v1001, 0
      %v1749 = vsel %vm1316, %v1002, 0
      %v1752 = vsel %vm1316, %v1003, 0
      %v1755 = vsel %vm1316, %v1004, 0
      %v1758 = vsel %vm1316, %v1005, 0
      %v1761 = vsel %vm1316, %v1006, 0
      %v1764 = vsel %vm1316, %v1007, 0
      %v1767 = vsel %vm1316, %v1008, 0
      %v1770 = vsel %vm1316, %v1009, 0
      %v1773 = vsel %vm1316, %v1010, 0
      %v1776 = vsel %vm1316, %v1011, 0
      %v1779 = vsel %vm1316, %v1012, 0
      %v1782 = vsel %vm1316, %v1013, 0
      %v1785 = vsel %vm1316, %v1014, 0
      %v1788 = vsel %vm1316, %v1015, 0
      %v1791 = vsel %vm1316, %v1016, 0
      %v1794 = vsel %vm1316, %v1017, 0
      %v1797 = vsel %vm1316, %v1018, 0
      %v1800 = vsel %vm1316, %v1019, 0
      %v1803 = vsel %vm1316, %v1020, 0
      %v1806 = vsel %vm1316, %v1021, 0
      %v1809 = vsel %vm1316, %v1022, 0
      %v1812 = vsel %vm1316, %v1023, 0
      %v1815 = vsel %vm1316, %v1024, 0
      %v1818 = vsel %vm1316, %v1025, 0
      %v1821 = vsel %vm1316, %v1026, 0
      %v1824 = vsel %vm1316, %v1027, 0
      %v1827 = vsel %vm1316, %v1028, 0
      %v1830 = vsel %vm1316, %v1029, 0
      %1832 = vmatpush.msra.mxu0 0.0
      %1833 = vmatpush.msra.mxu0 0.0
      %1834 = vmatpush.msra.mxu0 0.0
      %1835 = vmatpush.msra.mxu0 0.0
      %1836 = vmatpush.msra.mxu0 0.0
      %1837 = vmatpush.msra.mxu0 0.0
      %1838 = vmatpush.msra.mxu0 0.0
      %1839 = vmatpush.msra.mxu0 0.0
      %1840 = vmatpush.msra.mxu0 0.0
      %1841 = vmatpush.msra.mxu0 0.0
      %1842 = vmatpush.msra.mxu0 0.0
      %1843 = vmatpush.msra.mxu0 0.0
      %1844 = vmatpush.msra.mxu0 0.0
      %1845 = vmatpush.msra.mxu0 0.0
      %1846 = vmatpush.msra.mxu0 0.0
      %1847 = vmatpush.msra.mxu0 %v1735
      %1848 = vmatmul.f32.gmra.mxu0 %v1737
      %v1849 = vpop.f32.mrf.mxu0
      %v1850 = vadd.f32 0.0, %v1849
      %1851 = vmatmul.f32.gmra.mxu0 %v1740
      %v1852 = vpop.f32.mrf.mxu0
      %v1853 = vadd.f32 0.0, %v1852
      %1854 = vmatmul.f32.gmra.mxu0 %v1743
      %v1855 = vpop.f32.mrf.mxu0
      %v1856 = vadd.f32 0.0, %v1855
      %1857 = vmatmul.f32.gmra.mxu0 %v1746
      %v1858 = vpop.f32.mrf.mxu0
      %v1859 = vadd.f32 0.0, %v1858
      %1860 = vmatmul.f32.gmra.mxu0 %v1749
      %v1861 = vpop.f32.mrf.mxu0
      %v1862 = vadd.f32 0.0, %v1861
      %1863 = vmatmul.f32.gmra.mxu0 %v1752
      %v1864 = vpop.f32.mrf.mxu0
      %v1865 = vadd.f32 0.0, %v1864
      %1866 = vmatmul.f32.gmra.mxu0 %v1755
      %v1867 = vpop.f32.mrf.mxu0
      %v1868 = vadd.f32 0.0, %v1867
      %1869 = vmatmul.f32.gmra.mxu0 %v1758
      %v1870 = vpop.f32.mrf.mxu0
      %v1871 = vadd.f32 0.0, %v1870
      %1872 = vmatmul.f32.gmra.mxu0 %v1761
      %v1873 = vpop.f32.mrf.mxu0
      %v1874 = vadd.f32 0.0, %v1873
      %1875 = vmatmul.f32.gmra.mxu0 %v1764
      %v1876 = vpop.f32.mrf.mxu0
      %v1877 = vadd.f32 0.0, %v1876
      %1878 = vmatmul.f32.gmra.mxu0 %v1767
      %v1879 = vpop.f32.mrf.mxu0
      %v1880 = vadd.f32 0.0, %v1879
      %1881 = vmatmul.f32.gmra.mxu0 %v1770
      %v1882 = vpop.f32.mrf.mxu0
      %v1883 = vadd.f32 0.0, %v1882
      %1884 = vmatmul.f32.gmra.mxu0 %v1773
      %v1885 = vpop.f32.mrf.mxu0
      %v1886 = vadd.f32 0.0, %v1885
      %1887 = vmatmul.f32.gmra.mxu0 %v1776
      %v1888 = vpop.f32.mrf.mxu0
      %v1889 = vadd.f32 0.0, %v1888
      %1890 = vmatmul.f32.gmra.mxu0 %v1779
      %v1891 = vpop.f32.mrf.mxu0
      %v1892 = vadd.f32 0.0, %v1891
      %1893 = vmatmul.f32.gmra.mxu0 %v1782
      %v1894 = vpop.f32.mrf.mxu0
      %v1895 = vadd.f32 0.0, %v1894
      %1896 = vmatmul.f32.gmra.mxu0 %v1785
      %v1897 = vpop.f32.mrf.mxu0
      %v1898 = vadd.f32 0.0, %v1897
      %1899 = vmatmul.f32.gmra.mxu0 %v1788
      %v1900 = vpop.f32.mrf.mxu0
      %v1901 = vadd.f32 0.0, %v1900
      %1902 = vmatmul.f32.gmra.mxu0 %v1791
      %v1903 = vpop.f32.mrf.mxu0
      %v1904 = vadd.f32 0.0, %v1903
      %1905 = vmatmul.f32.gmra.mxu0 %v1794
      %v1906 = vpop.f32.mrf.mxu0
      %v1907 = vadd.f32 0.0, %v1906
      %1908 = vmatmul.f32.gmra.mxu0 %v1797
      %v1909 = vpop.f32.mrf.mxu0
      %v1910 = vadd.f32 0.0, %v1909
      %1911 = vmatmul.f32.gmra.mxu0 %v1800
      %v1912 = vpop.f32.mrf.mxu0
      %v1913 = vadd.f32 0.0, %v1912
      %1914 = vmatmul.f32.gmra.mxu0 %v1803
      %v1915 = vpop.f32.mrf.mxu0
      %v1916 = vadd.f32 0.0, %v1915
      %1917 = vmatmul.f32.gmra.mxu0 %v1806
      %v1918 = vpop.f32.mrf.mxu0
      %v1919 = vadd.f32 0.0, %v1918
      %1920 = vmatmul.f32.gmra.mxu0 %v1809
      %v1921 = vpop.f32.mrf.mxu0
      %v1922 = vadd.f32 0.0, %v1921
      %1923 = vmatmul.f32.gmra.mxu0 %v1812
      %v1924 = vpop.f32.mrf.mxu0
      %v1925 = vadd.f32 0.0, %v1924
      %1926 = vmatmul.f32.gmra.mxu0 %v1815
      %v1927 = vpop.f32.mrf.mxu0
      %v1928 = vadd.f32 0.0, %v1927
      %1929 = vmatmul.f32.gmra.mxu0 %v1818
      %v1930 = vpop.f32.mrf.mxu0
      %v1931 = vadd.f32 0.0, %v1930
      %1932 = vmatmul.f32.gmra.mxu0 %v1821
      %v1933 = vpop.f32.mrf.mxu0
      %v1934 = vadd.f32 0.0, %v1933
      %1935 = vmatmul.f32.gmra.mxu0 %v1824
      %v1936 = vpop.f32.mrf.mxu0
      %v1937 = vadd.f32 0.0, %v1936
      %1938 = vmatmul.f32.gmra.mxu0 %v1827
      %v1939 = vpop.f32.mrf.mxu0
      %v1940 = vadd.f32 0.0, %v1939
      %1941 = vmatmul.f32.gmra.mxu0 %v1830
      %v1942 = vpop.f32.mrf.mxu0
      %v1943 = vadd.f32 0.0, %v1942
      %1944 = vdwg.mxu0
      %v1945 = vadd.f32 %v1640, %v1850
      %v1946 = vadd.f32 %v1643, %v1853
      %v1947 = vadd.f32 %v1646, %v1856
      %v1948 = vadd.f32 %v1649, %v1859
      %v1949 = vadd.f32 %v1652, %v1862
      %v1950 = vadd.f32 %v1655, %v1865
      %v1951 = vadd.f32 %v1658, %v1868
      %v1952 = vadd.f32 %v1661, %v1871
      %v1953 = vadd.f32 %v1664, %v1874
      %v1954 = vadd.f32 %v1667, %v1877
      %v1955 = vadd.f32 %v1670, %v1880
      %v1956 = vadd.f32 %v1673, %v1883
      %v1957 = vadd.f32 %v1676, %v1886
      %v1958 = vadd.f32 %v1679, %v1889
      %v1959 = vadd.f32 %v1682, %v1892
      %v1960 = vadd.f32 %v1685, %v1895
      %v1961 = vadd.f32 %v1688, %v1898
      %v1962 = vadd.f32 %v1691, %v1901
      %v1963 = vadd.f32 %v1694, %v1904
      %v1964 = vadd.f32 %v1697, %v1907
      %v1965 = vadd.f32 %v1700, %v1910
      %v1966 = vadd.f32 %v1703, %v1913
      %v1967 = vadd.f32 %v1706, %v1916
      %v1968 = vadd.f32 %v1709, %v1919
      %v1969 = vadd.f32 %v1712, %v1922
      %v1970 = vadd.f32 %v1715, %v1925
      %v1971 = vadd.f32 %v1718, %v1928
      %v1972 = vadd.f32 %v1721, %v1931
      %v1973 = vadd.f32 %v1724, %v1934
      %v1974 = vadd.f32 %v1727, %v1937
      %v1975 = vadd.f32 %v1730, %v1940
      %v1976 = vadd.f32 %v1733, %v1943
      %v1977 = vld [vmem:[%s8 + $0x18] sm:$0xff]
      %v1979 = vsel %vm1316, %v1282, 0
      %v1982 = vsel %vm1316, %v1283, 0
      %v1985 = vsel %vm1316, %v1284, 0
      %v1988 = vsel %vm1316, %v1285, 0
      %v1991 = vsel %vm1316, %v1286, 0
      %v1994 = vsel %vm1316, %v1287, 0
      %v1997 = vsel %vm1316, %v1288, 0
      %v2000 = vsel %vm1316, %v1289, 0
      %v2003 = vsel %vm1316, %v1290, 0
      %v2006 = vsel %vm1316, %v1291, 0
      %v2009 = vsel %vm1316, %v1292, 0
      %v2012 = vsel %vm1316, %v1293, 0
      %v2015 = vsel %vm1316, %v1294, 0
      %v2018 = vsel %vm1316, %v1295, 0
      %v2021 = vsel %vm1316, %v1296, 0
      %v2024 = vsel %vm1316, %v1297, 0
      %v2027 = vsel %vm1316, %v1298, 0
      %v2030 = vsel %vm1316, %v1299, 0
      %v2033 = vsel %vm1316, %v1300, 0
      %v2036 = vsel %vm1316, %v1301, 0
      %v2039 = vsel %vm1316, %v1302, 0
      %v2042 = vsel %vm1316, %v1303, 0
      %v2045 = vsel %vm1316, %v1304, 0
      %v2048 = vsel %vm1316, %v1305, 0
      %v2051 = vsel %vm1316, %v1306, 0
      %v2054 = vsel %vm1316, %v1307, 0
      %v2057 = vsel %vm1316, %v1308, 0
      %v2060 = vsel %vm1316, %v1309, 0
      %v2063 = vsel %vm1316, %v1310, 0
      %v2066 = vsel %vm1316, %v1311, 0
      %v2069 = vsel %vm1316, %v1312, 0
      %v2072 = vsel %vm1316, %v1313, 0
      %2074 = vmatpush.msra.mxu0 0.0
      %2075 = vmatpush.msra.mxu0 0.0
      %2076 = vmatpush.msra.mxu0 0.0
      %2077 = vmatpush.msra.mxu0 0.0
      %2078 = vmatpush.msra.mxu0 0.0
      %2079 = vmatpush.msra.mxu0 0.0
      %2080 = vmatpush.msra.mxu0 0.0
      %2081 = vmatpush.msra.mxu0 0.0
      %2082 = vmatpush.msra.mxu0 0.0
      %2083 = vmatpush.msra.mxu0 0.0
      %2084 = vmatpush.msra.mxu0 0.0
      %2085 = vmatpush.msra.mxu0 0.0
      %2086 = vmatpush.msra.mxu0 0.0
      %2087 = vmatpush.msra.mxu0 0.0
      %2088 = vmatpush.msra.mxu0 0.0
      %2089 = vmatpush.msra.mxu0 %v1977
      %2090 = vmatmul.f32.gmra.mxu0 %v1979
      %v2091 = vpop.f32.mrf.mxu0
      %v2092 = vadd.f32 0.0, %v2091
      %2093 = vmatmul.f32.gmra.mxu0 %v1982
      %v2094 = vpop.f32.mrf.mxu0
      %v2095 = vadd.f32 0.0, %v2094
      %2096 = vmatmul.f32.gmra.mxu0 %v1985
      %v2097 = vpop.f32.mrf.mxu0
      %v2098 = vadd.f32 0.0, %v2097
      %2099 = vmatmul.f32.gmra.mxu0 %v1988
      %v2100 = vpop.f32.mrf.mxu0
      %v2101 = vadd.f32 0.0, %v2100
      %2102 = vmatmul.f32.gmra.mxu0 %v1991
      %v2103 = vpop.f32.mrf.mxu0
      %v2104 = vadd.f32 0.0, %v2103
      %2105 = vmatmul.f32.gmra.mxu0 %v1994
      %v2106 = vpop.f32.mrf.mxu0
      %v2107 = vadd.f32 0.0, %v2106
      %2108 = vmatmul.f32.gmra.mxu0 %v1997
      %v2109 = vpop.f32.mrf.mxu0
      %v2110 = vadd.f32 0.0, %v2109
      %2111 = vmatmul.f32.gmra.mxu0 %v2000
      %v2112 = vpop.f32.mrf.mxu0
      %v2113 = vadd.f32 0.0, %v2112
      %2114 = vmatmul.f32.gmra.mxu0 %v2003
      %v2115 = vpop.f32.mrf.mxu0
      %v2116 = vadd.f32 0.0, %v2115
      %2117 = vmatmul.f32.gmra.mxu0 %v2006
      %v2118 = vpop.f32.mrf.mxu0
      %v2119 = vadd.f32 0.0, %v2118
      %2120 = vmatmul.f32.gmra.mxu0 %v2009
      %v2121 = vpop.f32.mrf.mxu0
      %v2122 = vadd.f32 0.0, %v2121
      %2123 = vmatmul.f32.gmra.mxu0 %v2012
      %v2124 = vpop.f32.mrf.mxu0
      %v2125 = vadd.f32 0.0, %v2124
      %2126 = vmatmul.f32.gmra.mxu0 %v2015
      %v2127 = vpop.f32.mrf.mxu0
      %v2128 = vadd.f32 0.0, %v2127
      %2129 = vmatmul.f32.gmra.mxu0 %v2018
      %v2130 = vpop.f32.mrf.mxu0
      %v2131 = vadd.f32 0.0, %v2130
      %2132 = vmatmul.f32.gmra.mxu0 %v2021
      %v2133 = vpop.f32.mrf.mxu0
      %v2134 = vadd.f32 0.0, %v2133
      %2135 = vmatmul.f32.gmra.mxu0 %v2024
      %v2136 = vpop.f32.mrf.mxu0
      %v2137 = vadd.f32 0.0, %v2136
      %2138 = vmatmul.f32.gmra.mxu0 %v2027
      %v2139 = vpop.f32.mrf.mxu0
      %v2140 = vadd.f32 0.0, %v2139
      %2141 = vmatmul.f32.gmra.mxu0 %v2030
      %v2142 = vpop.f32.mrf.mxu0
      %v2143 = vadd.f32 0.0, %v2142
      %2144 = vmatmul.f32.gmra.mxu0 %v2033
      %v2145 = vpop.f32.mrf.mxu0
      %v2146 = vadd.f32 0.0, %v2145
      %2147 = vmatmul.f32.gmra.mxu0 %v2036
      %v2148 = vpop.f32.mrf.mxu0
      %v2149 = vadd.f32 0.0, %v2148
      %2150 = vmatmul.f32.gmra.mxu0 %v2039
      %v2151 = vpop.f32.mrf.mxu0
      %v2152 = vadd.f32 0.0, %v2151
      %2153 = vmatmul.f32.gmra.mxu0 %v2042
      %v2154 = vpop.f32.mrf.mxu0
      %v2155 = vadd.f32 0.0, %v2154
      %2156 = vmatmul.f32.gmra.mxu0 %v2045
      %v2157 = vpop.f32.mrf.mxu0
      %v2158 = vadd.f32 0.0, %v2157
      %2159 = vmatmul.f32.gmra.mxu0 %v2048
      %v2160 = vpop.f32.mrf.mxu0
      %v2161 = vadd.f32 0.0, %v2160
      %2162 = vmatmul.f32.gmra.mxu0 %v2051
      %v2163 = vpop.f32.mrf.mxu0
      %v2164 = vadd.f32 0.0, %v2163
      %2165 = vmatmul.f32.gmra.mxu0 %v2054
      %v2166 = vpop.f32.mrf.mxu0
      %v2167 = vadd.f32 0.0, %v2166
      %2168 = vmatmul.f32.gmra.mxu0 %v2057
      %v2169 = vpop.f32.mrf.mxu0
      %v2170 = vadd.f32 0.0, %v2169
      %2171 = vmatmul.f32.gmra.mxu0 %v2060
      %v2172 = vpop.f32.mrf.mxu0
      %v2173 = vadd.f32 0.0, %v2172
      %2174 = vmatmul.f32.gmra.mxu0 %v2063
      %v2175 = vpop.f32.mrf.mxu0
      %v2176 = vadd.f32 0.0, %v2175
      %2177 = vmatmul.f32.gmra.mxu0 %v2066
      %v2178 = vpop.f32.mrf.mxu0
      %v2179 = vadd.f32 0.0, %v2178
      %2180 = vmatmul.f32.gmra.mxu0 %v2069
      %v2181 = vpop.f32.mrf.mxu0
      %v2182 = vadd.f32 0.0, %v2181
      %2183 = vmatmul.f32.gmra.mxu0 %v2072
      %v2184 = vpop.f32.mrf.mxu0
      %v2185 = vadd.f32 0.0, %v2184
      %2186 = vdwg.mxu0
      %v2187 = vadd.f32 %v1945, %v2092
      %v2188 = vadd.f32 %v1946, %v2095
      %v2189 = vadd.f32 %v1947, %v2098
      %v2190 = vadd.f32 %v1948, %v2101
      %v2191 = vadd.f32 %v1949, %v2104
      %v2192 = vadd.f32 %v1950, %v2107
      %v2193 = vadd.f32 %v1951, %v2110
      %v2194 = vadd.f32 %v1952, %v2113
      %v2195 = vadd.f32 %v1953, %v2116
      %v2196 = vadd.f32 %v1954, %v2119
      %v2197 = vadd.f32 %v1955, %v2122
      %v2198 = vadd.f32 %v1956, %v2125
      %v2199 = vadd.f32 %v1957, %v2128
      %v2200 = vadd.f32 %v1958, %v2131
      %v2201 = vadd.f32 %v1959, %v2134
      %v2202 = vadd.f32 %v1960, %v2137
      %v2203 = vadd.f32 %v1961, %v2140
      %v2204 = vadd.f32 %v1962, %v2143
      %v2205 = vadd.f32 %v1963, %v2146
      %v2206 = vadd.f32 %v1964, %v2149
      %v2207 = vadd.f32 %v1965, %v2152
      %v2208 = vadd.f32 %v1966, %v2155
      %v2209 = vadd.f32 %v1967, %v2158
      %v2210 = vadd.f32 %v1968, %v2161
      %v2211 = vadd.f32 %v1969, %v2164
      %v2212 = vadd.f32 %v1970, %v2167
      %v2213 = vadd.f32 %v1971, %v2170
      %v2214 = vadd.f32 %v1972, %v2173
      %v2215 = vadd.f32 %v1973, %v2176
      %v2216 = vadd.f32 %v1974, %v2179
      %v2217 = vadd.f32 %v1975, %v2182
      %v2218 = vadd.f32 %v1976, %v2185
      %v2219 = vld [vmem:[%s9] sm:$0x1]
      %v2221 = vperm.slane %v2219, 0
      %v2223 = vadd.f32 %v2187, %v2221
      %v2224 = vadd.f32 %v2188, %v2221
      %v2225 = vadd.f32 %v2189, %v2221
      %v2226 = vadd.f32 %v2190, %v2221
      %v2227 = vadd.f32 %v2191, %v2221
      %v2228 = vadd.f32 %v2192, %v2221
      %v2229 = vadd.f32 %v2193, %v2221
      %v2230 = vadd.f32 %v2194, %v2221
      %v2231 = vadd.f32 %v2195, %v2221
      %v2232 = vadd.f32 %v2196, %v2221
      %v2233 = vadd.f32 %v2197, %v2221
      %v2234 = vadd.f32 %v2198, %v2221
      %v2235 = vadd.f32 %v2199, %v2221
      %v2236 = vadd.f32 %v2200, %v2221
      %v2237 = vadd.f32 %v2201, %v2221
      %v2238 = vadd.f32 %v2202, %v2221
      %v2239 = vadd.f32 %v2203, %v2221
      %v2240 = vadd.f32 %v2204, %v2221
      %v2241 = vadd.f32 %v2205, %v2221
      %v2242 = vadd.f32 %v2206, %v2221
      %v2243 = vadd.f32 %v2207, %v2221
      %v2244 = vadd.f32 %v2208, %v2221
      %v2245 = vadd.f32 %v2209, %v2221
      %v2246 = vadd.f32 %v2210, %v2221
      %v2247 = vadd.f32 %v2211, %v2221
      %v2248 = vadd.f32 %v2212, %v2221
      %v2249 = vadd.f32 %v2213, %v2221
      %v2250 = vadd.f32 %v2214, %v2221
      %v2251 = vadd.f32 %v2215, %v2221
      %v2252 = vadd.f32 %v2216, %v2221
      %v2253 = vadd.f32 %v2217, %v2221
      %v2254 = vadd.f32 %v2218, %v2221
      %v2255 = vmax.f32 %v2223, 0.0
      %v2256 = vmax.f32 %v2224, 0.0
      %v2257 = vmax.f32 %v2225, 0.0
      %v2258 = vmax.f32 %v2226, 0.0
      %v2259 = vmax.f32 %v2227, 0.0
      %v2260 = vmax.f32 %v2228, 0.0
      %v2261 = vmax.f32 %v2229, 0.0
      %v2262 = vmax.f32 %v2230, 0.0
      %v2263 = vmax.f32 %v2231, 0.0
      %v2264 = vmax.f32 %v2232, 0.0
      %v2265 = vmax.f32 %v2233, 0.0
      %v2266 = vmax.f32 %v2234, 0.0
      %v2267 = vmax.f32 %v2235, 0.0
      %v2268 = vmax.f32 %v2236, 0.0
      %v2269 = vmax.f32 %v2237, 0.0
      %v2270 = vmax.f32 %v2238, 0.0
      %v2271 = vmax.f32 %v2239, 0.0
      %v2272 = vmax.f32 %v2240, 0.0
      %v2273 = vmax.f32 %v2241, 0.0
      %v2274 = vmax.f32 %v2242, 0.0
      %v2275 = vmax.f32 %v2243, 0.0
      %v2276 = vmax.f32 %v2244, 0.0
      %v2277 = vmax.f32 %v2245, 0.0
      %v2278 = vmax.f32 %v2246, 0.0
      %v2279 = vmax.f32 %v2247, 0.0
      %v2280 = vmax.f32 %v2248, 0.0
      %v2281 = vmax.f32 %v2249, 0.0
      %v2282 = vmax.f32 %v2250, 0.0
      %v2283 = vmax.f32 %v2251, 0.0
      %v2284 = vmax.f32 %v2252, 0.0
      %v2285 = vmax.f32 %v2253, 0.0
      %v2286 = vmax.f32 %v2254, 0.0
      %v2287 = vmul.f32 %v429, 0.5
      %v2288 = vmul.f32 %v430, 0.5
      %v2289 = vmul.f32 %v431, 0.5
      %v2290 = vmul.f32 %v432, 0.5
      %v2291 = vmul.f32 %v433, 0.5
      %v2292 = vmul.f32 %v434, 0.5
      %v2293 = vmul.f32 %v435, 0.5
      %v2294 = vmul.f32 %v436, 0.5
      %v2295 = vmul.f32 %v437, 0.5
      %v2296 = vmul.f32 %v438, 0.5
      %v2297 = vmul.f32 %v439, 0.5
      %v2298 = vmul.f32 %v440, 0.5
      %v2299 = vmul.f32 %v441, 0.5
      %v2300 = vmul.f32 %v442, 0.5
      %v2301 = vmul.f32 %v443, 0.5
      %v2302 = vmul.f32 %v444, 0.5
      %v2303 = vmul.f32 %v445, 0.5
      %v2304 = vmul.f32 %v446, 0.5
      %v2305 = vmul.f32 %v447, 0.5
      %v2306 = vmul.f32 %v448, 0.5
      %v2307 = vmul.f32 %v449, 0.5
      %v2308 = vmul.f32 %v450, 0.5
      %v2309 = vmul.f32 %v451, 0.5
      %v2310 = vmul.f32 %v452, 0.5
      %v2311 = vmul.f32 %v453, 0.5
      %v2312 = vmul.f32 %v454, 0.5
      %v2313 = vmul.f32 %v455, 0.5
      %v2314 = vmul.f32 %v456, 0.5
      %v2315 = vmul.f32 %v457, 0.5
      %v2316 = vmul.f32 %v458, 0.5
      %v2317 = vmul.f32 %v459, 0.5
      %v2318 = vmul.f32 %v460, 0.5
      %2351 = vrot.lane.b32.xlu0 %v2287, 96
      %v2352 = vpop.permute.xlu0 %2351
      %2353 = vrot.lane.b32.xlu0 %v2288, 96
      %v2354 = vpop.permute.xlu0 %2353
      %2355 = vrot.lane.b32.xlu0 %v2289, 96
      %v2356 = vpop.permute.xlu0 %2355
      %2357 = vrot.lane.b32.xlu0 %v2290, 96
      %v2358 = vpop.permute.xlu0 %2357
      %2359 = vrot.lane.b32.xlu0 %v2291, 96
      %v2360 = vpop.permute.xlu0 %2359
      %2361 = vrot.lane.b32.xlu0 %v2292, 96
      %v2362 = vpop.permute.xlu0 %2361
      %2363 = vrot.lane.b32.xlu0 %v2293, 96
      %v2364 = vpop.permute.xlu0 %2363
      %2365 = vrot.lane.b32.xlu0 %v2294, 96
      %v2366 = vpop.permute.xlu0 %2365
      %2367 = vrot.lane.b32.xlu0 %v2295, 96
      %v2368 = vpop.permute.xlu0 %2367
      %2369 = vrot.lane.b32.xlu0 %v2296, 96
      %v2370 = vpop.permute.xlu0 %2369
      %2371 = vrot.lane.b32.xlu0 %v2297, 96
      %v2372 = vpop.permute.xlu0 %2371
      %2373 = vrot.lane.b32.xlu0 %v2298, 96
      %v2374 = vpop.permute.xlu0 %2373
      %2375 = vrot.lane.b32.xlu0 %v2299, 96
      %v2376 = vpop.permute.xlu0 %2375
      %2377 = vrot.lane.b32.xlu0 %v2300, 96
      %v2378 = vpop.permute.xlu0 %2377
      %2379 = vrot.lane.b32.xlu0 %v2301, 96
      %v2380 = vpop.permute.xlu0 %2379
      %2381 = vrot.lane.b32.xlu0 %v2302, 96
      %v2382 = vpop.permute.xlu0 %2381
      %2383 = vrot.lane.b32.xlu0 %v2303, 96
      %v2384 = vpop.permute.xlu0 %2383
      %2385 = vrot.lane.b32.xlu0 %v2304, 96
      %v2386 = vpop.permute.xlu0 %2385
      %2387 = vrot.lane.b32.xlu0 %v2305, 96
      %v2388 = vpop.permute.xlu0 %2387
      %2389 = vrot.lane.b32.xlu0 %v2306, 96
      %v2390 = vpop.permute.xlu0 %2389
      %2391 = vrot.lane.b32.xlu0 %v2307, 96
      %v2392 = vpop.permute.xlu0 %2391
      %2393 = vrot.lane.b32.xlu0 %v2308, 96
      %v2394 = vpop.permute.xlu0 %2393
      %2395 = vrot.lane.b32.xlu0 %v2309, 96
      %v2396 = vpop.permute.xlu0 %2395
      %2397 = vrot.lane.b32.xlu0 %v2310, 96
      %v2398 = vpop.permute.xlu0 %2397
      %2399 = vrot.lane.b32.xlu0 %v2311, 96
      %v2400 = vpop.permute.xlu0 %2399
      %2401 = vrot.lane.b32.xlu0 %v2312, 96
      %v2402 = vpop.permute.xlu0 %2401
      %2403 = vrot.lane.b32.xlu0 %v2313, 96
      %v2404 = vpop.permute.xlu0 %2403
      %2405 = vrot.lane.b32.xlu0 %v2314, 96
      %v2406 = vpop.permute.xlu0 %2405
      %2407 = vrot.lane.b32.xlu0 %v2315, 96
      %v2408 = vpop.permute.xlu0 %2407
      %2409 = vrot.lane.b32.xlu0 %v2316, 96
      %v2410 = vpop.permute.xlu0 %2409
      %2411 = vrot.lane.b32.xlu0 %v2317, 96
      %v2412 = vpop.permute.xlu0 %2411
      %2413 = vrot.lane.b32.xlu0 %v2318, 96
      %v2414 = vpop.permute.xlu0 %2413
      %v2447 = vadd.f32 %v2255, %v2352
      %v2448 = vadd.f32 %v2256, %v2354
      %v2449 = vadd.f32 %v2257, %v2356
      %v2450 = vadd.f32 %v2258, %v2358
      %v2451 = vadd.f32 %v2259, %v2360
      %v2452 = vadd.f32 %v2260, %v2362
      %v2453 = vadd.f32 %v2261, %v2364
      %v2454 = vadd.f32 %v2262, %v2366
      %v2455 = vadd.f32 %v2263, %v2368
      %v2456 = vadd.f32 %v2264, %v2370
      %v2457 = vadd.f32 %v2265, %v2372
      %v2458 = vadd.f32 %v2266, %v2374
      %v2459 = vadd.f32 %v2267, %v2376
      %v2460 = vadd.f32 %v2268, %v2378
      %v2461 = vadd.f32 %v2269, %v2380
      %v2462 = vadd.f32 %v2270, %v2382
      %v2463 = vadd.f32 %v2271, %v2384
      %v2464 = vadd.f32 %v2272, %v2386
      %v2465 = vadd.f32 %v2273, %v2388
      %v2466 = vadd.f32 %v2274, %v2390
      %v2467 = vadd.f32 %v2275, %v2392
      %v2468 = vadd.f32 %v2276, %v2394
      %v2469 = vadd.f32 %v2277, %v2396
      %v2470 = vadd.f32 %v2278, %v2398
      %v2471 = vadd.f32 %v2279, %v2400
      %v2472 = vadd.f32 %v2280, %v2402
      %v2473 = vadd.f32 %v2281, %v2404
      %v2474 = vadd.f32 %v2282, %v2406
      %v2475 = vadd.f32 %v2283, %v2408
      %v2476 = vadd.f32 %v2284, %v2410
      %v2477 = vadd.f32 %v2285, %v2412
      %v2478 = vadd.f32 %v2286, %v2414
      %2479 = vst.msk [vmem:[%s427] sm:$0xff] %vm1316, %v2447
      %2480 = vst.msk [vmem:[%s427 + $0x8] sm:$0xff] %vm1316, %v2448
      %2481 = vst.msk [vmem:[%s427 + $0x10] sm:$0xff] %vm1316, %v2449
      %2482 = vst.msk [vmem:[%s427 + $0x18] sm:$0xff] %vm1316, %v2450
      %2483 = vst.msk [vmem:[%s427 + $0x20] sm:$0xff] %vm1316, %v2451
      %2484 = vst.msk [vmem:[%s427 + $0x28] sm:$0xff] %vm1316, %v2452
      %2485 = vst.msk [vmem:[%s427 + $0x30] sm:$0xff] %vm1316, %v2453
      %2486 = vst.msk [vmem:[%s427 + $0x38] sm:$0xff] %vm1316, %v2454
      %2487 = vst.msk [vmem:[%s427 + $0x40] sm:$0xff] %vm1316, %v2455
      %2488 = vst.msk [vmem:[%s427 + $0x48] sm:$0xff] %vm1316, %v2456
      %2489 = vst.msk [vmem:[%s427 + $0x50] sm:$0xff] %vm1316, %v2457
      %2490 = vst.msk [vmem:[%s427 + $0x58] sm:$0xff] %vm1316, %v2458
      %2491 = vst.msk [vmem:[%s427 + $0x60] sm:$0xff] %vm1316, %v2459
      %2492 = vst.msk [vmem:[%s427 + $0x68] sm:$0xff] %vm1316, %v2460
      %2493 = vst.msk [vmem:[%s427 + $0x70] sm:$0xff] %vm1316, %v2461
      %2494 = vst.msk [vmem:[%s427 + $0x78] sm:$0xff] %vm1316, %v2462
      %2495 = vst.msk [vmem:[%s427 + $0x80] sm:$0xff] %vm1316, %v2463
      %2496 = vst.msk [vmem:[%s427 + $0x88] sm:$0xff] %vm1316, %v2464
      %2497 = vst.msk [vmem:[%s427 + $0x90] sm:$0xff] %vm1316, %v2465
      %2498 = vst.msk [vmem:[%s427 + $0x98] sm:$0xff] %vm1316, %v2466
      %2499 = vst.msk [vmem:[%s427 + $0xa0] sm:$0xff] %vm1316, %v2467
      %2500 = vst.msk [vmem:[%s427 + $0xa8] sm:$0xff] %vm1316, %v2468
      %2501 = vst.msk [vmem:[%s427 + $0xb0] sm:$0xff] %vm1316, %v2469
      %2502 = vst.msk [vmem:[%s427 + $0xb8] sm:$0xff] %vm1316, %v2470
      %2503 = vst.msk [vmem:[%s427 + $0xc0] sm:$0xff] %vm1316, %v2471
      %2504 = vst.msk [vmem:[%s427 + $0xc8] sm:$0xff] %vm1316, %v2472
      %2505 = vst.msk [vmem:[%s427 + $0xd0] sm:$0xff] %vm1316, %v2473
      %2506 = vst.msk [vmem:[%s427 + $0xd8] sm:$0xff] %vm1316, %v2474
      %2507 = vst.msk [vmem:[%s427 + $0xe0] sm:$0xff] %vm1316, %v2475
      %2508 = vst.msk [vmem:[%s427 + $0xe8] sm:$0xff] %vm1316, %v2476
      %2509 = vst.msk [vmem:[%s427 + $0xf0] sm:$0xff] %vm1316, %v2477
      %2510 = vst.msk [vmem:[%s427 + $0xf8] sm:$0xff] %vm1316, %v2478
      %s2511 = smul.u32 32, %s21
      %p2512 = scmp.lt.s32.totalorder %s2511, 63
      %s2513 = scalar_select %p2512, %s2511, 63
      %s2514 = smul.addr %s2513, 8
      %s2515 = scalar_lea.vmem %s10, %s2514
      // Predicated region
      $region61: #{dilated_inception_block.3} parent=59 // pred_check
        %p2516 = pneg %p269
      $region62: #{dilated_inception_block.3} parent=59 // pred_check_branch
        %2518 = sbr.rel (%p2516) target = $region64
      $region63: #{dilated_inception_block.3} parent=59 // pred_region
        %s2519 = smul.u32 32, %s21
      $region64: #{dilated_inception_block.3} parent=59 // pred_fallthru
        _
    $region60: #{dilated_inception_block.3} parent=5 // pred_fallthru
      _
    %p2520 = scmp.le.s32.totalorder 2, %s16
    // Predicated region
    $region65: #{dilated_inception_block.3} parent=5 // pred_check
      %p2521 = pneg %p2520
    $region66: #{dilated_inception_block.3} parent=5 // pred_check_branch
      %2523 = sbr.rel (%p2521) target = $region68
    $region67: #{dilated_inception_block.3} parent=5 // pred_region
      %s2524 = ssub.s32 %s16, 2
      // Predicated region
      $region69: #{dilated_inception_block.3} parent=67 // pred_check
        %p2525 = pneg %p275
      $region70: #{dilated_inception_block.3} parent=67 // pred_check_branch
        %2527 = sbr.rel (%p2525) target = $region72
      $region71: #{dilated_inception_block.3} parent=67 // pred_region
        %s2528 = smul.u32 32, %s22
        %p2529 = scmp.lt.s32.totalorder %s2528, 63
        %s2530 = scalar_select %p2529, %s2528, 63
        %s2531 = smul.addr %s2530, 8
        %s2532 = scalar_lea.vmem %s10, %s2531
      $region72: #{dilated_inception_block.3} parent=67 // pred_fallthru
        _
    $region68: #{dilated_inception_block.3} parent=5 // pred_fallthru
      _
  $region6: #{dilated_inception_block.3} parent=0 // loop_footer
    %s20 = sadd.s32 1, %s16
  $region7: #{dilated_inception_block.3} parent=0 // loop_footer_branch
    %15 = sbr.rel target = $region3
  $region8: #{dilated_inception_block.3} parent=0 // loop_exit
    _

</llo_original>
